<compile_context>
chip_gen: v6e
topology: v6e:2x2x1
jax: 0.10.0
libtpu: 0.0.40
codegen_flags: <defaults>
</compile_context>

<pallas_src>
import numpy as np
import jax
import jax.numpy as jnp
from jax import lax
from jax.experimental import pallas as pl
from jax.experimental.pallas import tpu as pltpu

# ---------------- static problem sizes (SimpleCNN, num_classes=10) ----------
B = 2
NUM_CLASSES = 10
C_IN, H_IN, W_IN = 3, 16, 32            # input  (B, 3, 16, 32)
C1, C2, K = 6, 20, 5                    # conv1 3->6 (5x5), conv2 6->20 (5x5)
H1, W1 = H_IN - K + 1, W_IN - K + 1     # 12, 28   (conv1 out)
H1P, W1P = H1 // 2, W1 // 2             # 6, 14    (pool1 out)
H2, W2 = H1P - K + 1, W1P - K + 1       # 2, 10    (conv2 out)
H2P, W2P = H2 // 2, W2 // 2             # 1, 5     -> 20*1*5 = 100 FC features

# ---- per-batch flat "row grid" sizes ----------------------------------------
H_PAD = H_IN + 2                        # pad H 16 -> 18 so shifted reads stay in bounds
ROWS_X = H_PAD * W_IN                   # 576 input rows,  r = h*32 + w
R1 = 400                                # conv1 grid,      r = oy*32 + ox
RP1 = 360                               # pool1 grid,      r = 64*py + 2*px
R2 = 96                                 # conv2 grid,      r = 64*oy2 + 2*ox2
RP2 = 24                                # pool2 grid,      r = 4*px2
ROWS5 = R2 + 2 * W_IN * (K - 1)         # 352: rows of the conv2 dx-intermediate pm5

LANES = 128                             # lane-dense padding width
KC1 = K * K * C_IN                      # 75  conv1 im2col K
KC2 = K * K * C1                        # 150 conv2 im2col K
FCK = W2P * C2                          # 100 fc features

# ---- packed-constant slab layout (rows; all offsets 8-aligned) ---------------
W1_OFF, W2_OFF, WF_OFF = 0, 128, 280    # w1 rows 0:128 (75 real), w2 128:278, wf 280:380
B1_OFF, B2_OFF, BF_OFF = 384, 392, 400
SLAB_ROWS = 408


def simple_cnn_forward(x_nchw, w1, b1, w2, b2, wf, bf):
    """Layout glue + one pallas_call (2-wide parallel grid, batch folded into M)."""
    bsz = x_nchw.shape[0]
    n_steps = 2 if (bsz % 2 == 0 and bsz >= 2) else 1   # one step per TC on v7x
    bpc = bsz // n_steps                                # batch elems folded into M per step

    # -------- conv1 im2col hoisted to the wrapper (lane-dense input slab) ----
    x_hwc = jnp.transpose(x_nchw, (0, 2, 3, 1)).astype(jnp.float32)        # (B,16,32,3)
    x_pad = jnp.pad(x_hwc, ((0, 0), (0, H_PAD - H_IN), (0, 0), (0, 0)))    # (B,18,32,3)
    x_rows = x_pad.reshape(bsz, ROWS_X, C_IN)                              # (B,576,3)
    cols = [x_rows[:, ky * W_IN + kx: ky * W_IN + kx + R1, :]              # col=(ky*5+kx)*3+ic
            for ky in range(K) for kx in range(K)]
    p1 = jnp.concatenate(cols, axis=2)                                     # (B,400,75)
    p1 = jnp.pad(p1, ((0, 0), (0, 0), (0, LANES - KC1)))                   # (B,400,128)

    # -------- pack all constants into one pre-padded f32 slab (single DMA) ---
    w1_mat = jnp.transpose(w1, (2, 3, 1, 0)).reshape(KC1, C1)              # row=(ky*5+kx)*3+ic
    w2_mat = jnp.transpose(w2, (2, 3, 1, 0)).reshape(KC2, C2)              # row=(ky*5+kx)*6+ic
    wf_mat = jnp.transpose(wf.reshape(NUM_CLASSES, C2, W2P), (2, 1, 0)
                           ).reshape(FCK, NUM_CLASSES)                     # row = w*20 + c
    slab = jnp.zeros((SLAB_ROWS, LANES), jnp.float32)
    slab = slab.at[W1_OFF:W1_OFF + KC1, 0:C1].set(w1_mat)   # rows 75..127 stay zero (K pad)
    slab = slab.at[W2_OFF:W2_OFF + KC2, 0:C2].set(w2_mat)
    slab = slab.at[WF_OFF:WF_OFF + FCK, 0:NUM_CLASSES].set(wf_mat)         # lanes 10.. zero
    slab = slab.at[B1_OFF, 0:C1].set(b1.astype(jnp.float32))
    slab = slab.at[B2_OFF, 0:C2].set(b2.astype(jnp.float32))
    slab = slab.at[BF_OFF, 0:NUM_CLASSES].set(bf.astype(jnp.float32))

    def kernel(p1_ref, slab_ref, o_ref):
        # ---- conv1: one (bpc*400,128)@(128,6) MXU matmul + bias + relu ------
        p1v = p1_ref[...].reshape(bpc * R1, LANES)
        h1 = jnp.maximum(
            jnp.dot(p1v, slab_ref[W1_OFF:W1_OFF + LANES, 0:C1],
                    preferred_element_type=jnp.float32)
            + slab_ref[B1_OFF:B1_OFF + 1, 0:C1], 0.0)
        h1 = h1.reshape(bpc, R1, C1)                          # rows r = oy*32 + ox

        # ---- maxpool1 2x2/2, factored: dx-max then 8-aligned dy-max ---------
        t1 = jnp.maximum(h1[:, 0:RP1 + W_IN, :], h1[:, 1:RP1 + W_IN + 1, :])
        pm = jnp.maximum(t1[:, 0:RP1, :], t1[:, W_IN:W_IN + RP1, :])   # (bpc,360,6)

        # ---- conv2 im2col, two-level (5 narrow dx + 5 aligned dy pieces) ----
        pm5 = jnp.concatenate(                                 # (bpc, 352, 30)
            [pm[:, 2 * kx:2 * kx + ROWS5, :] for kx in range(K)], axis=2)
        patches2 = jnp.concatenate(                            # (bpc, 96, 150)
            [pm5[:, 2 * W_IN * ky:2 * W_IN * ky + R2, :] for ky in range(K)], axis=2)
        h2 = jnp.maximum(
            jnp.dot(patches2.reshape(bpc * R2, KC2),
                    slab_ref[W2_OFF:W2_OFF + KC2, 0:C2],
                    preferred_element_type=jnp.float32)
            + slab_ref[B2_OFF:B2_OFF + 1, 0:C2], 0.0)
        h2 = h2.reshape(bpc, R2, C2)                           # rows 64*oy2 + 2*ox2

        # ---- maxpool2 2x2/2, factored ---------------------------------------
        t2 = jnp.maximum(h2[:, 0:RP2 + 2 * W_IN, :], h2[:, 2:RP2 + 2 * W_IN + 2, :])
        q2 = jnp.maximum(t2[:, 0:RP2, :], t2[:, 2 * W_IN:2 * W_IN + RP2, :])  # (bpc,24,20)

        # ---- fc1: gather 5 valid rows to lanes, one (bpc,100)@(100,128) -----
        xfc = jnp.concatenate(
            [q2[:, 4 * j:4 * j + 1, :] for j in range(W2P)], axis=2
        ).reshape(bpc, FCK)                                    # lanes j*20 + c
        out = jnp.maximum(
            jnp.dot(xfc, slab_ref[WF_OFF:WF_OFF + FCK, :],
                    preferred_element_type=jnp.float32)
            + slab_ref[BF_OFF:BF_OFF + 1, :], 0.0)             # (bpc,128) lane-dense
        o_ref[...] = out.reshape(bpc, 1, LANES)

    out = pl.pallas_call(
        kernel,
        out_shape=jax.ShapeDtypeStruct((bsz, 1, LANES), jnp.float32),
        grid=(n_steps,),
        in_specs=[
            pl.BlockSpec((bpc, R1, LANES), lambda s: (s, 0, 0)),
            pl.BlockSpec((SLAB_ROWS, LANES), lambda s: (0, 0)),
        ],
        out_specs=pl.BlockSpec((bpc, 1, LANES), lambda s: (s, 0, 0)),
        compiler_params=pltpu.CompilerParams(
            dimension_semantics=("parallel",)),      # shards batch steps across TCs on v7x
    )(p1, slab)
    return out.reshape(bsz, LANES)[:, :NUM_CLASSES]


def reference_forward(x, w1, b1, w2, b2, wf, bf):
    """Pure-JAX reference mirroring the PyTorch module."""
    dn = ('NCHW', 'OIHW', 'NCHW')
    y = lax.conv_general_dilated(x, w1, (1, 1), 'VALID', dimension_numbers=dn)
    y = jax.nn.relu(y + b1.reshape(1, -1, 1, 1))
    y = lax.reduce_window(y, -jnp.inf, lax.max, (1, 1, 2, 2), (1, 1, 2, 2), 'VALID')
    y = lax.conv_general_dilated(y, w2, (1, 1), 'VALID', dimension_numbers=dn)
    y = jax.nn.relu(y + b2.reshape(1, -1, 1, 1))
    y = lax.reduce_window(y, -jnp.inf, lax.max, (1, 1, 2, 2), (1, 1, 2, 2), 'VALID')
    y = y.reshape(y.shape[0], -1)                 # (B, 20*1*5)
    y = jax.nn.relu(y @ wf.T + bf)
    return y


if __name__ == "__main__":
    key = jax.random.PRNGKey(0)
    kx, k1, k2, k3, k4, k5, k6 = jax.random.split(key, 7)

    x = jax.random.normal(kx, (B, C_IN, H_IN, W_IN), jnp.float32)
    w1 = 0.1 * jax.random.normal(k1, (C1, C_IN, K, K), jnp.float32)
    b1 = 0.05 * jax.random.normal(k2, (C1,), jnp.float32)
    w2 = 0.1 * jax.random.normal(k3, (C2, C1, K, K), jnp.float32)
    b2 = 0.05 * jax.random.normal(k4, (C2,), jnp.float32)
    wf = 0.1 * jax.random.normal(k5, (NUM_CLASSES, C2 * H2P * W2P), jnp.float32)
    bf = 0.05 * jax.random.normal(k6, (NUM_CLASSES,), jnp.float32)

    out = jax.jit(simple_cnn_forward)(x, w1, b1, w2, b2, wf, bf)
    out = jax.block_until_ready(out)

    ref = jax.block_until_ready(reference_forward(x, w1, b1, w2, b2, wf, bf))
    np.testing.assert_allclose(np.asarray(out), np.asarray(ref), rtol=1e-4, atol=1e-4)

    print("KERNEL_OK")
</pallas_src>

<mosaic_0001>
module attributes {stable_mosaic.version = 11 : i64} {
  func.func @kernel(%arg0: i32, %arg1: memref<1x400x128xf32, #tpu.memory_space<vmem>>, %arg2: memref<408x128xf32, #tpu.memory_space<vmem>>, %arg3: memref<1x1x128xf32, #tpu.memory_space<vmem>>) attributes {dimension_semantics = [#tpu.dimension_semantics<parallel>], iteration_bounds = array<i64: 2>, scalar_prefetch = 0 : i64, scratch_operands = 0 : i64, tpu.core_type = #tpu.core_type<tc>, window_params = [{transform_indices = @transform_0, window_bounds = array<i64: 1, 400, 128>}, {pipeline_mode = #tpu.pipeline_mode<synchronous>, transform_indices = @transform_1, window_bounds = array<i64: 408, 128>}, {transform_indices = @transform_2, window_bounds = array<i64: 1, 1, 128>}]} {
    %c0 = arith.constant 0 : index
    %c0_0 = arith.constant 0 : index
    %c0_1 = arith.constant 0 : index
    %0 = vector.load %arg1[%c0, %c0_0, %c0_1] : memref<1x400x128xf32, #tpu.memory_space<vmem>>, vector<1x400x128xf32>
    %1 = vector.shape_cast %0 : vector<1x400x128xf32> to vector<400x128xf32>
    %c0_2 = arith.constant 0 : index
    %c0_3 = arith.constant 0 : index
    %2 = vector.load %arg2[%c0_2, %c0_3] : memref<408x128xf32, #tpu.memory_space<vmem>>, vector<128x6xf32>
    %cst = arith.constant dense<0.000000e+00> : vector<400x6xf32>
    %3 = tpu.matmul %1, %2, %cst {dimension_numbers = #tpu.dot_dimension_numbers<[1], [0], [0], [1], [0, 0, 1, 1], [], []>} : vector<400x128xf32>, vector<128x6xf32>, vector<400x6xf32> -> vector<400x6xf32>
    %c384 = arith.constant 384 : index
    %c0_4 = arith.constant 0 : index
    %4 = vector.load %arg2[%c384, %c0_4] : memref<408x128xf32, #tpu.memory_space<vmem>>, vector<1x6xf32>
    %5 = vector.broadcast %4 : vector<1x6xf32> to vector<400x6xf32>
    %6 = arith.addf %3, %5 : vector<400x6xf32>
    %cst_5 = arith.constant 0.000000e+00 : f32
    %7 = vector.broadcast %cst_5 : f32 to vector<400x6xf32>
    %8 = arith.maximumf %6, %7 : vector<400x6xf32>
    %9 = vector.shape_cast %8 : vector<400x6xf32> to vector<1x400x6xf32>
    %10 = vector.extract_strided_slice %9 {offsets = [0, 0, 0], sizes = [1, 392, 6], strides = [1, 1, 1]} : vector<1x400x6xf32> to vector<1x392x6xf32>
    %11 = vector.extract_strided_slice %9 {offsets = [0, 1, 0], sizes = [1, 392, 6], strides = [1, 1, 1]} : vector<1x400x6xf32> to vector<1x392x6xf32>
    %12 = arith.maximumf %10, %11 : vector<1x392x6xf32>
    %13 = vector.extract_strided_slice %12 {offsets = [0, 0, 0], sizes = [1, 360, 6], strides = [1, 1, 1]} : vector<1x392x6xf32> to vector<1x360x6xf32>
    %14 = vector.extract_strided_slice %12 {offsets = [0, 32, 0], sizes = [1, 360, 6], strides = [1, 1, 1]} : vector<1x392x6xf32> to vector<1x360x6xf32>
    %15 = arith.maximumf %13, %14 : vector<1x360x6xf32>
    %16 = vector.extract_strided_slice %15 {offsets = [0, 0, 0], sizes = [1, 352, 6], strides = [1, 1, 1]} : vector<1x360x6xf32> to vector<1x352x6xf32>
    %17 = vector.extract_strided_slice %15 {offsets = [0, 2, 0], sizes = [1, 352, 6], strides = [1, 1, 1]} : vector<1x360x6xf32> to vector<1x352x6xf32>
    %18 = vector.extract_strided_slice %15 {offsets = [0, 4, 0], sizes = [1, 352, 6], strides = [1, 1, 1]} : vector<1x360x6xf32> to vector<1x352x6xf32>
    %19 = vector.extract_strided_slice %15 {offsets = [0, 6, 0], sizes = [1, 352, 6], strides = [1, 1, 1]} : vector<1x360x6xf32> to vector<1x352x6xf32>
    %20 = vector.extract_strided_slice %15 {offsets = [0, 8, 0], sizes = [1, 352, 6], strides = [1, 1, 1]} : vector<1x360x6xf32> to vector<1x352x6xf32>
    %21 = tpu.concatenate %16, %17, %18, %19, %20 in 2 : vector<1x352x6xf32>, vector<1x352x6xf32>, vector<1x352x6xf32>, vector<1x352x6xf32>, vector<1x352x6xf32> -> vector<1x352x30xf32>
    %22 = vector.extract_strided_slice %21 {offsets = [0, 0, 0], sizes = [1, 96, 30], strides = [1, 1, 1]} : vector<1x352x30xf32> to vector<1x96x30xf32>
    %23 = vector.extract_strided_slice %21 {offsets = [0, 64, 0], sizes = [1, 96, 30], strides = [1, 1, 1]} : vector<1x352x30xf32> to vector<1x96x30xf32>
    %24 = vector.extract_strided_slice %21 {offsets = [0, 128, 0], sizes = [1, 96, 30], strides = [1, 1, 1]} : vector<1x352x30xf32> to vector<1x96x30xf32>
    %25 = vector.extract_strided_slice %21 {offsets = [0, 192, 0], sizes = [1, 96, 30], strides = [1, 1, 1]} : vector<1x352x30xf32> to vector<1x96x30xf32>
    %26 = vector.extract_strided_slice %21 {offsets = [0, 256, 0], sizes = [1, 96, 30], strides = [1, 1, 1]} : vector<1x352x30xf32> to vector<1x96x30xf32>
    %27 = tpu.concatenate %22, %23, %24, %25, %26 in 2 : vector<1x96x30xf32>, vector<1x96x30xf32>, vector<1x96x30xf32>, vector<1x96x30xf32>, vector<1x96x30xf32> -> vector<1x96x150xf32>
    %28 = vector.shape_cast %27 : vector<1x96x150xf32> to vector<96x150xf32>
    %c128 = arith.constant 128 : index
    %c0_6 = arith.constant 0 : index
    %29 = vector.load %arg2[%c128, %c0_6] : memref<408x128xf32, #tpu.memory_space<vmem>>, vector<150x20xf32>
    %cst_7 = arith.constant dense<0.000000e+00> : vector<96x20xf32>
    %30 = tpu.matmul %28, %29, %cst_7 {dimension_numbers = #tpu.dot_dimension_numbers<[1], [0], [0], [1], [0, 0, 1, 1], [], []>} : vector<96x150xf32>, vector<150x20xf32>, vector<96x20xf32> -> vector<96x20xf32>
    %c392 = arith.constant 392 : index
    %c0_8 = arith.constant 0 : index
    %31 = vector.load %arg2[%c392, %c0_8] : memref<408x128xf32, #tpu.memory_space<vmem>>, vector<1x20xf32>
    %32 = vector.broadcast %31 : vector<1x20xf32> to vector<96x20xf32>
    %33 = arith.addf %30, %32 : vector<96x20xf32>
    %cst_9 = arith.constant 0.000000e+00 : f32
    %34 = vector.broadcast %cst_9 : f32 to vector<96x20xf32>
    %35 = arith.maximumf %33, %34 : vector<96x20xf32>
    %36 = vector.shape_cast %35 : vector<96x20xf32> to vector<1x96x20xf32>
    %37 = vector.extract_strided_slice %36 {offsets = [0, 0, 0], sizes = [1, 88, 20], strides = [1, 1, 1]} : vector<1x96x20xf32> to vector<1x88x20xf32>
    %38 = vector.extract_strided_slice %36 {offsets = [0, 2, 0], sizes = [1, 88, 20], strides = [1, 1, 1]} : vector<1x96x20xf32> to vector<1x88x20xf32>
    %39 = arith.maximumf %37, %38 : vector<1x88x20xf32>
    %40 = vector.extract_strided_slice %39 {offsets = [0, 0, 0], sizes = [1, 24, 20], strides = [1, 1, 1]} : vector<1x88x20xf32> to vector<1x24x20xf32>
    %41 = vector.extract_strided_slice %39 {offsets = [0, 64, 0], sizes = [1, 24, 20], strides = [1, 1, 1]} : vector<1x88x20xf32> to vector<1x24x20xf32>
    %42 = arith.maximumf %40, %41 : vector<1x24x20xf32>
    %43 = vector.extract_strided_slice %42 {offsets = [0, 0, 0], sizes = [1, 1, 20], strides = [1, 1, 1]} : vector<1x24x20xf32> to vector<1x1x20xf32>
    %44 = vector.extract_strided_slice %42 {offsets = [0, 4, 0], sizes = [1, 1, 20], strides = [1, 1, 1]} : vector<1x24x20xf32> to vector<1x1x20xf32>
    %45 = vector.extract_strided_slice %42 {offsets = [0, 8, 0], sizes = [1, 1, 20], strides = [1, 1, 1]} : vector<1x24x20xf32> to vector<1x1x20xf32>
    %46 = vector.extract_strided_slice %42 {offsets = [0, 12, 0], sizes = [1, 1, 20], strides = [1, 1, 1]} : vector<1x24x20xf32> to vector<1x1x20xf32>
    %47 = vector.extract_strided_slice %42 {offsets = [0, 16, 0], sizes = [1, 1, 20], strides = [1, 1, 1]} : vector<1x24x20xf32> to vector<1x1x20xf32>
    %48 = tpu.concatenate %43, %44, %45, %46, %47 in 2 : vector<1x1x20xf32>, vector<1x1x20xf32>, vector<1x1x20xf32>, vector<1x1x20xf32>, vector<1x1x20xf32> -> vector<1x1x100xf32>
    %49 = vector.shape_cast %48 : vector<1x1x100xf32> to vector<1x100xf32>
    %c280 = arith.constant 280 : index
    %c0_10 = arith.constant 0 : index
    %50 = vector.load %arg2[%c280, %c0_10] : memref<408x128xf32, #tpu.memory_space<vmem>>, vector<100x128xf32>
    %cst_11 = arith.constant dense<0.000000e+00> : vector<1x128xf32>
    %51 = tpu.matmul %49, %50, %cst_11 {dimension_numbers = #tpu.dot_dimension_numbers<[1], [0], [0], [1], [0, 0, 1, 1], [], []>} : vector<1x100xf32>, vector<100x128xf32>, vector<1x128xf32> -> vector<1x128xf32>
    %c400 = arith.constant 400 : index
    %c0_12 = arith.constant 0 : index
    %52 = vector.load %arg2[%c400, %c0_12] : memref<408x128xf32, #tpu.memory_space<vmem>>, vector<1x128xf32>
    %53 = arith.addf %51, %52 : vector<1x128xf32>
    %cst_13 = arith.constant 0.000000e+00 : f32
    %54 = vector.broadcast %cst_13 : f32 to vector<1x128xf32>
    %55 = arith.maximumf %53, %54 : vector<1x128xf32>
    %56 = vector.shape_cast %55 : vector<1x128xf32> to vector<1x1x128xf32>
    %c0_14 = arith.constant 0 : index
    %c0_15 = arith.constant 0 : index
    %c0_16 = arith.constant 0 : index
    %57 = vector.load %arg3[%c0_14, %c0_15, %c0_16] : memref<1x1x128xf32, #tpu.memory_space<vmem>>, vector<1x1x128xf32>
    tpu.vector_store %arg3[%c0_14, %c0_15, %c0_16], %56 {strides = array<i32>} : memref<1x1x128xf32, #tpu.memory_space<vmem>>, vector<1x1x128xf32>,
    return
  }
  func.func @transform_0(%arg0: i32) -> (i32, i32, i32) {
    %c0_i32 = arith.constant 0 : i32
    %c0_i32_0 = arith.constant 0 : i32
    %c0_i32_1 = arith.constant 0 : i32
    return %arg0, %c0_i32, %c0_i32_0 : i32, i32, i32
  }
  func.func @transform_1(%arg0: i32) -> (i32, i32) {
    %c0_i32 = arith.constant 0 : i32
    %c0_i32_0 = arith.constant 0 : i32
    %c0_i32_1 = arith.constant 0 : i32
    return %c0_i32, %c0_i32_0 : i32, i32
  }
  func.func @transform_2(%arg0: i32) -> (i32, i32, i32) {
    %c0_i32 = arith.constant 0 : i32
    %c0_i32_0 = arith.constant 0 : i32
    %c0_i32_1 = arith.constant 0 : i32
    return %arg0, %c0_i32, %c0_i32_0 : i32, i32, i32
  }
}

</mosaic_0001>

<llo_original>
// kernel: simple_cnn_forward.1
$region0: #{simple_cnn_forward.1}
  #allocation0 [shape = 'u32[]', space=smem, size = 0x4, offset = 0x4, fixed_abs, tag = 'smem constant byte address 0x4 - core index']
  #allocation1 [shape = 'u32[144,128]{1,0:T(1,128)}', space=vmem, size = 0x12000, scoped, tag = 'internal scratch']
  %s0 = inlined_call_operand.vmem [shape: f32[2,400,128], index: 0, kind: input, shape index: {}]
  %s1 = inlined_call_operand.vmem [shape: f32[408,128], index: 1, kind: input, shape index: {}]
  %s2 = inlined_call_operand.hbm [shape: f32[2,1,128], index: 2, kind: output, shape index: {}]
  %s3 = sld [smem:[#allocation0]]
  $region41: #{simple_cnn_forward.1} parent=0
    _
  %s5 = ssub.s32 1, %s3
  %s6 = scalar_select 0, %s5, %s3
  $region1: #{simple_cnn_forward.1} parent=0
    #allocation2 [shape = 'u8[1024]{0}', space=vmem, size = 0x400, scoped, tag = 'output window, operand 0']
    #allocation3 [shape = 's32[2]{0}', space=sflag, size = 0x8, scoped, tag = 'scoped memory for simple_cnn_forward.1']
    %7 = vsyncpa [#allocation3], 0
    %s8 = scalar_lea.sflag [#allocation3], 1
    %9 = vsyncpa %s8, 0
    loop: start=0, step=1, limit=4
    $region2: #{simple_cnn_forward.1} parent=1 // loop_pre_header
      _
    $region3: #{simple_cnn_forward.1} parent=1 // loop_header
      %s11 = sphi 0, %s15
      %p12 = scmp.ge.s32.totalorder %s11, 4
      %s21 = sphi 0, %s23
      %s24 = sphi 0, %s21
      %s25 = sphi 0, %s24
      %s41 = sphi 0, %s25
      %s45 = sphi 0, %s45
      %s47 = sphi 0, %s45
      %s48 = sphi 0, %s47
      %s62 = sphi 0, %s48
      %s68 = sphi 0, %s70
      %s71 = sphi 0, %s68
      %s72 = sphi 0, %s71
      %s88 = sphi 0, %s72
    $region4: #{simple_cnn_forward.1} parent=1 // loop_header_branch
      %14 = sbr.rel (%p12) target = $region8
    $region5: #{simple_cnn_forward.1} parent=1 // loop_body
      %s16 = ssub.s32 %s11, 1
      %s17 = ssub.s32 %s11, 2
      %s18 = sadd.s32 %s11, 1
      %s19 = ssub.s32 %s11, %s18
      %p20 = scmp.eq.s32.totalorder %s19, 0
      %s22 = sadd.s32 %s21, 1
      %s23 = scalar_select %p20, %s21, %s22
      %p26 = pneg %p20
      %p27 = scmp.eq.s32.totalorder %s11, 1
      %p28 = por %p26, %p27
      %p29 = scmp.ne.s32.totalorder %s21, %s24
      %p30 = scmp.eq.s32.totalorder %s11, 0
      %p31 = por %p29, %p30
      %p32 = scmp.ne.s32.totalorder %s21, %s24
      %p33 = scmp.eq.s32.totalorder %s16, 1
      %p34 = por %p32, %p33
      %p35 = scmp.ne.s32.totalorder %s24, %s25
      %p36 = scmp.eq.s32.totalorder %s16, 0
      %p37 = por %p35, %p36
      %p38 = scmp.ne.s32.totalorder %s24, %s25
      %p39 = scmp.eq.s32.totalorder %s17, 1
      %p40 = por %p38, %p39
      %p42 = scmp.ne.s32.totalorder %s25, %s41
      %p43 = scmp.eq.s32.totalorder %s17, 0
      %p44 = por %p42, %p43
      %s46 = sadd.s32 %s45, 1
      %p49 = scmp.eq.s32.totalorder %s11, 1
      %p50 = scmp.ne.s32.totalorder %s45, %s47
      %p51 = scmp.eq.s32.totalorder %s11, 0
      %p52 = por %p50, %p51
      %p53 = scmp.ne.s32.totalorder %s45, %s47
      %p54 = scmp.eq.s32.totalorder %s16, 1
      %p55 = por %p53, %p54
      %p56 = scmp.ne.s32.totalorder %s47, %s48
      %p57 = scmp.eq.s32.totalorder %s16, 0
      %p58 = por %p56, %p57
      %p59 = scmp.ne.s32.totalorder %s47, %s48
      %p60 = scmp.eq.s32.totalorder %s17, 1
      %p61 = por %p59, %p60
      %p63 = scmp.ne.s32.totalorder %s48, %s62
      %p64 = scmp.eq.s32.totalorder %s17, 0
      %p65 = por %p63, %p64
      %s66 = ssub.s32 %s11, %s18
      %p67 = scmp.eq.s32.totalorder %s66, 0
      %s69 = sadd.s32 %s68, 1
      %s70 = scalar_select %p67, %s68, %s69
      %p73 = pneg %p67
      %p74 = scmp.eq.s32.totalorder %s11, 1
      %p75 = por %p73, %p74
      %p76 = scmp.ne.s32.totalorder %s68, %s71
      %p77 = scmp.eq.s32.totalorder %s11, 0
      %p78 = por %p76, %p77
      %p79 = scmp.ne.s32.totalorder %s68, %s71
      %p80 = scmp.eq.s32.totalorder %s16, 1
      %p81 = por %p79, %p80
      %p82 = scmp.ne.s32.totalorder %s71, %s72
      %p83 = scmp.eq.s32.totalorder %s16, 0
      %p84 = por %p82, %p83
      %p85 = scmp.ne.s32.totalorder %s71, %s72
      %p86 = scmp.eq.s32.totalorder %s17, 1
      %p87 = por %p85, %p86
      %p89 = scmp.ne.s32.totalorder %s72, %s88
      %p90 = scmp.eq.s32.totalorder %s17, 0
      %p91 = por %p89, %p90
      %p92 = scmp.le.s32.totalorder 1, %s11
      %p93 = scmp.lt.s32.totalorder %s11, 3
      %p94 = pnand %p92, %p93
      %p95 = pneg %p94
      // Predicated region
      $region9: #{simple_cnn_forward.1} parent=5 // pred_check
        _
      $region10: #{simple_cnn_forward.1} parent=5 // pred_check_branch
        %97 = sbr.rel (%p94) target = $region12
      $region11: #{simple_cnn_forward.1} parent=5 // pred_region
        %s98 = ssub.s32 %s11, 1
        // Predicated region
        $region13: #{simple_cnn_forward.1} parent=11 // pred_check
          %p99 = pneg %p58
        $region14: #{simple_cnn_forward.1} parent=11 // pred_check_branch
          %101 = sbr.rel (%p99) target = $region16
        $region15: #{simple_cnn_forward.1} parent=11 // pred_region
          _
        $region16: #{simple_cnn_forward.1} parent=11 // pred_fallthru
          _
      $region12: #{simple_cnn_forward.1} parent=5 // pred_fallthru
        _
      %p102 = scmp.lt.s32.totalorder %s11, 2
      // Predicated region
      $region17: #{simple_cnn_forward.1} parent=5 // pred_check
        %p103 = pneg %p102
      $region18: #{simple_cnn_forward.1} parent=5 // pred_check_branch
        %105 = sbr.rel (%p103) target = $region20
      $region19: #{simple_cnn_forward.1} parent=5 // pred_region
        // Predicated region
        $region21: #{simple_cnn_forward.1} parent=19 // pred_check
          %p106 = pneg %p31
        $region22: #{simple_cnn_forward.1} parent=19 // pred_check_branch
          %108 = sbr.rel (%p106) target = $region24
        $region23: #{simple_cnn_forward.1} parent=19 // pred_region
          %p109 = scmp.lt.s32.totalorder %s11, 1
          %s110 = scalar_select %p109, %s11, 1
          %s111 = smul.addr %s110, 50
          %s112 = smul.addr %s111, 8
          %s113 = scalar_lea.vmem %s0, %s112
        $region24: #{simple_cnn_forward.1} parent=19 // pred_fallthru
          _
      $region20: #{simple_cnn_forward.1} parent=5 // pred_fallthru
        _
      %p114 = scmp.le.s32.totalorder 1, %s11
      %p115 = scmp.lt.s32.totalorder %s11, 3
      %p116 = pnand %p114, %p115
      %p117 = pneg %p116
      // Predicated region
      $region25: #{simple_cnn_forward.1} parent=5 // pred_check
        _
      $region26: #{simple_cnn_forward.1} parent=5 // pred_check_branch
        %119 = sbr.rel (%p116) target = $region28
      $region27: #{simple_cnn_forward.1} parent=5 // pred_region
        %s120 = ssub.s32 %s11, 1
        %p121 = scmp.lt.s32.totalorder %s16, 1
        %s122 = scalar_select %p121, %s16, 1
        %s123 = smul.addr %s122, 50
        %s124 = smul.addr %s123, 8
        %s125 = scalar_lea.vmem %s0, %s124
        %p126 = pneg %p37
        %p127 = pneg %p34
        %p128 = pneg %p58
        %p129 = pneg %p55
        %p130 = pneg %p84
        %p131 = pneg %p81
        %s132 = sand.u32 %s71, 1
        %s133 = scalar_lea.sflag [#allocation3], %s132
        %s134 = sand.u32 %s71, 1
        %s135 = scalar_lea.vmem [#allocation2], %s134
        %p136 = scmp.lt.s32.totalorder %s16, 1
        %s137 = scalar_select %p136, %s16, 1
        %s138 = smul.addr %s137, 50
        %s139 = smul.addr %s138, 8
        %s140 = scalar_lea.vmem %s0, %s139
        %v141 = vld [vmem:[%s140] sm:$0xff]
        %v142 = vld [vmem:[%s140 + $0x8] sm:$0xff]
        %v143 = vld [vmem:[%s140 + $0x10] sm:$0xff]
        %v144 = vld [vmem:[%s140 + $0x18] sm:$0xff]
        %v145 = vld [vmem:[%s140 + $0x20] sm:$0xff]
        %v146 = vld [vmem:[%s140 + $0x28] sm:$0xff]
        %v147 = vld [vmem:[%s140 + $0x30] sm:$0xff]
        %v148 = vld [vmem:[%s140 + $0x38] sm:$0xff]
        %v149 = vld [vmem:[%s140 + $0x40] sm:$0xff]
        %v150 = vld [vmem:[%s140 + $0x48] sm:$0xff]
        %v151 = vld [vmem:[%s140 + $0x50] sm:$0xff]
        %v152 = vld [vmem:[%s140 + $0x58] sm:$0xff]
        %v153 = vld [vmem:[%s140 + $0x60] sm:$0xff]
        %v154 = vld [vmem:[%s140 + $0x68] sm:$0xff]
        %v155 = vld [vmem:[%s140 + $0x70] sm:$0xff]
        %v156 = vld [vmem:[%s140 + $0x78] sm:$0xff]
        %v157 = vld [vmem:[%s140 + $0x80] sm:$0xff]
        %v158 = vld [vmem:[%s140 + $0x88] sm:$0xff]
        %v159 = vld [vmem:[%s140 + $0x90] sm:$0xff]
        %v160 = vld [vmem:[%s140 + $0x98] sm:$0xff]
        %v161 = vld [vmem:[%s140 + $0xa0] sm:$0xff]
        %v162 = vld [vmem:[%s140 + $0xa8] sm:$0xff]
        %v163 = vld [vmem:[%s140 + $0xb0] sm:$0xff]
        %v164 = vld [vmem:[%s140 + $0xb8] sm:$0xff]
        %v165 = vld [vmem:[%s140 + $0xc0] sm:$0xff]
        %v166 = vld [vmem:[%s140 + $0xc8] sm:$0xff]
        %v167 = vld [vmem:[%s140 + $0xd0] sm:$0xff]
        %v168 = vld [vmem:[%s140 + $0xd8] sm:$0xff]
        %v169 = vld [vmem:[%s140 + $0xe0] sm:$0xff]
        %v170 = vld [vmem:[%s140 + $0xe8] sm:$0xff]
        %v171 = vld [vmem:[%s140 + $0xf0] sm:$0xff]
        %v172 = vld [vmem:[%s140 + $0xf8] sm:$0xff]
        %v173 = vld [vmem:[%s140 + $0x100] sm:$0xff]
        %v174 = vld [vmem:[%s140 + $0x108] sm:$0xff]
        %v175 = vld [vmem:[%s140 + $0x110] sm:$0xff]
        %v176 = vld [vmem:[%s140 + $0x118] sm:$0xff]
        %v177 = vld [vmem:[%s140 + $0x120] sm:$0xff]
        %v178 = vld [vmem:[%s140 + $0x128] sm:$0xff]
        %v179 = vld [vmem:[%s140 + $0x130] sm:$0xff]
        %v180 = vld [vmem:[%s140 + $0x138] sm:$0xff]
        %v181 = vld [vmem:[%s140 + $0x140] sm:$0xff]
        %v182 = vld [vmem:[%s140 + $0x148] sm:$0xff]
        %v183 = vld [vmem:[%s140 + $0x150] sm:$0xff]
        %v184 = vld [vmem:[%s140 + $0x158] sm:$0xff]
        %v185 = vld [vmem:[%s140 + $0x160] sm:$0xff]
        %v186 = vld [vmem:[%s140 + $0x168] sm:$0xff]
        %v187 = vld [vmem:[%s140 + $0x170] sm:$0xff]
        %v188 = vld [vmem:[%s140 + $0x178] sm:$0xff]
        %v189 = vld [vmem:[%s140 + $0x180] sm:$0xff]
        %v190 = vld [vmem:[%s140 + $0x188] sm:$0xff]
        %v191 = vld [vmem:[%s1] sm:$0xff]
        %v192 = vld [vmem:[%s1 + $0x8] sm:$0xff]
        %v193 = vld [vmem:[%s1 + $0x10] sm:$0xff]
        %v194 = vld [vmem:[%s1 + $0x18] sm:$0xff]
        %v195 = vld [vmem:[%s1 + $0x20] sm:$0xff]
        %v196 = vld [vmem:[%s1 + $0x28] sm:$0xff]
        %v197 = vld [vmem:[%s1 + $0x30] sm:$0xff]
        %v198 = vld [vmem:[%s1 + $0x38] sm:$0xff]
        %v199 = vld [vmem:[%s1 + $0x40] sm:$0xff]
        %v200 = vld [vmem:[%s1 + $0x48] sm:$0xff]
        %v201 = vld [vmem:[%s1 + $0x50] sm:$0xff]
        %v202 = vld [vmem:[%s1 + $0x58] sm:$0xff]
        %v203 = vld [vmem:[%s1 + $0x60] sm:$0xff]
        %v204 = vld [vmem:[%s1 + $0x68] sm:$0xff]
        %v205 = vld [vmem:[%s1 + $0x70] sm:$0xff]
        %v206 = vld [vmem:[%s1 + $0x78] sm:$0xff]
        %v207 = vld [vmem:[%s1 + $0x180] sm:$0x1]
        %v208 = vlaneseq
        %v209 = vshrl.u32 %v208, 7
        %v210 = vsub.s32 0, %v209
        %v211 = vrot.slane %v207, %v210
        %212 = vmatprep.subr.mxu0 0.0
        %213 = vmatpush1.msra.mxu0 %v206
        %214 = vmatprep.subr.mxu0 0.0
        %215 = vmatpush1.msra.mxu0 %v205
        %216 = vmatprep.subr.mxu0 0.0
        %217 = vmatpush1.msra.mxu0 %v204
        %218 = vmatprep.subr.mxu0 0.0
        %219 = vmatpush1.msra.mxu0 %v203
        %220 = vmatprep.subr.mxu0 0.0
        %221 = vmatpush1.msra.mxu0 %v202
        %222 = vmatprep.subr.mxu0 0.0
        %223 = vmatpush1.msra.mxu0 %v201
        %224 = vmatprep.subr.mxu0 0.0
        %225 = vmatpush1.msra.mxu0 %v200
        %226 = vmatprep.subr.mxu0 0.0
        %227 = vmatpush1.msra.mxu0 %v199
        %228 = vmatprep.subr.mxu0 0.0
        %229 = vmatpush1.msra.mxu0 %v198
        %230 = vmatprep.subr.mxu0 0.0
        %231 = vmatpush1.msra.mxu0 %v197
        %232 = vmatprep.subr.mxu0 0.0
        %233 = vmatpush1.msra.mxu0 %v196
        %234 = vmatprep.subr.mxu0 0.0
        %235 = vmatpush1.msra.mxu0 %v195
        %236 = vmatprep.subr.mxu0 0.0
        %237 = vmatpush1.msra.mxu0 %v194
        %238 = vmatprep.subr.mxu0 0.0
        %239 = vmatpush1.msra.mxu0 %v193
        %240 = vmatprep.subr.mxu0 0.0
        %241 = vmatpush1.msra.mxu0 %v192
        %242 = vmatprep.subr.mxu0 0.0
        %243 = vmatpush1.msra.mxu0 %v191
        %244 = vmatprep.subr.mxu0 0.0
        %245 = vmatpush2.msra.mxu0 0.0
        %246 = vmatprep.subr.mxu0 0.0
        %247 = vmatpush2.msra.mxu0 0.0
        %248 = vmatprep.subr.mxu0 0.0
        %249 = vmatpush2.msra.mxu0 0.0
        %250 = vmatprep.subr.mxu0 0.0
        %251 = vmatpush2.msra.mxu0 0.0
        %252 = vmatprep.subr.mxu0 0.0
        %253 = vmatpush2.msra.mxu0 0.0
        %254 = vmatprep.subr.mxu0 0.0
        %255 = vmatpush2.msra.mxu0 0.0
        %256 = vmatprep.subr.mxu0 0.0
        %257 = vmatpush2.msra.mxu0 0.0
        %258 = vmatprep.subr.mxu0 0.0
        %259 = vmatpush2.msra.mxu0 0.0
        %260 = vmatprep.subr.mxu0 0.0
        %261 = vmatpush2.msra.mxu0 0.0
        %262 = vmatprep.subr.mxu0 0.0
        %263 = vmatpush2.msra.mxu0 0.0
        %264 = vmatprep.subr.mxu0 0.0
        %265 = vmatpush2.msra.mxu0 0.0
        %266 = vmatprep.subr.mxu0 0.0
        %267 = vmatpush2.msra.mxu0 0.0
        %268 = vmatprep.subr.mxu0 0.0
        %269 = vmatpush2.msra.mxu0 0.0
        %270 = vmatprep.subr.mxu0 0.0
        %271 = vmatpush2.msra.mxu0 0.0
        %272 = vmatprep.subr.mxu0 0.0
        %273 = vmatpush2.msra.mxu0 0.0
        %274 = vmatprep.subr.mxu0 0.0
        %275 = vmatpush2.msra.mxu0 0.0
        %276 = vmatprep.mubr.f32.mxu0 0.0
        %277 = vmatmul.mubr.f32.gmra.mxu0 %v141
        %v278 = vpop.f32.mrf.mxu0
        %v279 = vadd.f32 %v211, %v278
        %v280 = vpop.f32.mrf.mxu0
        %281 = vmatprep.mubr.f32.mxu0 0.0
        %282 = vmatmul.mubr.f32.gmra.mxu0 %v142
        %v283 = vpop.f32.mrf.mxu0
        %v284 = vadd.f32 %v211, %v283
        %v285 = vpop.f32.mrf.mxu0
        %286 = vmatprep.mubr.f32.mxu0 0.0
        %287 = vmatmul.mubr.f32.gmra.mxu0 %v143
        %v288 = vpop.f32.mrf.mxu0
        %v289 = vadd.f32 %v211, %v288
        %v290 = vpop.f32.mrf.mxu0
        %291 = vmatprep.mubr.f32.mxu0 0.0
        %292 = vmatmul.mubr.f32.gmra.mxu0 %v144
        %v293 = vpop.f32.mrf.mxu0
        %v294 = vadd.f32 %v211, %v293
        %v295 = vpop.f32.mrf.mxu0
        %296 = vmatprep.mubr.f32.mxu0 0.0
        %297 = vmatmul.mubr.f32.gmra.mxu0 %v145
        %v298 = vpop.f32.mrf.mxu0
        %v299 = vadd.f32 %v211, %v298
        %v300 = vpop.f32.mrf.mxu0
        %301 = vmatprep.mubr.f32.mxu0 0.0
        %302 = vmatmul.mubr.f32.gmra.mxu0 %v146
        %v303 = vpop.f32.mrf.mxu0
        %v304 = vadd.f32 %v211, %v303
        %v305 = vpop.f32.mrf.mxu0
        %306 = vmatprep.mubr.f32.mxu0 0.0
        %307 = vmatmul.mubr.f32.gmra.mxu0 %v147
        %v308 = vpop.f32.mrf.mxu0
        %v309 = vadd.f32 %v211, %v308
        %v310 = vpop.f32.mrf.mxu0
        %311 = vmatprep.mubr.f32.mxu0 0.0
        %312 = vmatmul.mubr.f32.gmra.mxu0 %v148
        %v313 = vpop.f32.mrf.mxu0
        %v314 = vadd.f32 %v211, %v313
        %v315 = vpop.f32.mrf.mxu0
        %316 = vmatprep.mubr.f32.mxu0 0.0
        %317 = vmatmul.mubr.f32.gmra.mxu0 %v149
        %v318 = vpop.f32.mrf.mxu0
        %v319 = vadd.f32 %v211, %v318
        %v320 = vpop.f32.mrf.mxu0
        %321 = vmatprep.mubr.f32.mxu0 0.0
        %322 = vmatmul.mubr.f32.gmra.mxu0 %v150
        %v323 = vpop.f32.mrf.mxu0
        %v324 = vadd.f32 %v211, %v323
        %v325 = vpop.f32.mrf.mxu0
        %326 = vmatprep.mubr.f32.mxu0 0.0
        %327 = vmatmul.mubr.f32.gmra.mxu0 %v151
        %v328 = vpop.f32.mrf.mxu0
        %v329 = vadd.f32 %v211, %v328
        %v330 = vpop.f32.mrf.mxu0
        %331 = vmatprep.mubr.f32.mxu0 0.0
        %332 = vmatmul.mubr.f32.gmra.mxu0 %v152
        %v333 = vpop.f32.mrf.mxu0
        %v334 = vadd.f32 %v211, %v333
        %v335 = vpop.f32.mrf.mxu0
        %336 = vmatprep.mubr.f32.mxu0 0.0
        %337 = vmatmul.mubr.f32.gmra.mxu0 %v153
        %v338 = vpop.f32.mrf.mxu0
        %v339 = vadd.f32 %v211, %v338
        %v340 = vpop.f32.mrf.mxu0
        %341 = vmatprep.mubr.f32.mxu0 0.0
        %342 = vmatmul.mubr.f32.gmra.mxu0 %v154
        %v343 = vpop.f32.mrf.mxu0
        %v344 = vadd.f32 %v211, %v343
        %v345 = vpop.f32.mrf.mxu0
        %346 = vmatprep.mubr.f32.mxu0 0.0
        %347 = vmatmul.mubr.f32.gmra.mxu0 %v155
        %v348 = vpop.f32.mrf.mxu0
        %v349 = vadd.f32 %v211, %v348
        %v350 = vpop.f32.mrf.mxu0
        %351 = vmatprep.mubr.f32.mxu0 0.0
        %352 = vmatmul.mubr.f32.gmra.mxu0 %v156
        %v353 = vpop.f32.mrf.mxu0
        %v354 = vadd.f32 %v211, %v353
        %v355 = vpop.f32.mrf.mxu0
        %356 = vmatprep.mubr.f32.mxu0 0.0
        %357 = vmatmul.mubr.f32.gmra.mxu0 %v157
        %v358 = vpop.f32.mrf.mxu0
        %v359 = vadd.f32 %v211, %v358
        %v360 = vpop.f32.mrf.mxu0
        %361 = vmatprep.mubr.f32.mxu0 0.0
        %362 = vmatmul.mubr.f32.gmra.mxu0 %v158
        %v363 = vpop.f32.mrf.mxu0
        %v364 = vadd.f32 %v211, %v363
        %v365 = vpop.f32.mrf.mxu0
        %366 = vmatprep.mubr.f32.mxu0 0.0
        %367 = vmatmul.mubr.f32.gmra.mxu0 %v159
        %v368 = vpop.f32.mrf.mxu0
        %v369 = vadd.f32 %v211, %v368
        %v370 = vpop.f32.mrf.mxu0
        %371 = vmatprep.mubr.f32.mxu0 0.0
        %372 = vmatmul.mubr.f32.gmra.mxu0 %v160
        %v373 = vpop.f32.mrf.mxu0
        %v374 = vadd.f32 %v211, %v373
        %v375 = vpop.f32.mrf.mxu0
        %376 = vmatprep.mubr.f32.mxu0 0.0
        %377 = vmatmul.mubr.f32.gmra.mxu0 %v161
        %v378 = vpop.f32.mrf.mxu0
        %v379 = vadd.f32 %v211, %v378
        %v380 = vpop.f32.mrf.mxu0
        %381 = vmatprep.mubr.f32.mxu0 0.0
        %382 = vmatmul.mubr.f32.gmra.mxu0 %v162
        %v383 = vpop.f32.mrf.mxu0
        %v384 = vadd.f32 %v211, %v383
        %v385 = vpop.f32.mrf.mxu0
        %386 = vmatprep.mubr.f32.mxu0 0.0
        %387 = vmatmul.mubr.f32.gmra.mxu0 %v163
        %v388 = vpop.f32.mrf.mxu0
        %v389 = vadd.f32 %v211, %v388
        %v390 = vpop.f32.mrf.mxu0
        %391 = vmatprep.mubr.f32.mxu0 0.0
        %392 = vmatmul.mubr.f32.gmra.mxu0 %v164
        %v393 = vpop.f32.mrf.mxu0
        %v394 = vadd.f32 %v211, %v393
        %v395 = vpop.f32.mrf.mxu0
        %396 = vmatprep.mubr.f32.mxu0 0.0
        %397 = vmatmul.mubr.f32.gmra.mxu0 %v165
        %v398 = vpop.f32.mrf.mxu0
        %v399 = vadd.f32 %v211, %v398
        %v400 = vpop.f32.mrf.mxu0
        %401 = vmatprep.mubr.f32.mxu0 0.0
        %402 = vmatmul.mubr.f32.gmra.mxu0 %v166
        %v403 = vpop.f32.mrf.mxu0
        %v404 = vadd.f32 %v211, %v403
        %v405 = vpop.f32.mrf.mxu0
        %406 = vmatprep.mubr.f32.mxu0 0.0
        %407 = vmatmul.mubr.f32.gmra.mxu0 %v167
        %v408 = vpop.f32.mrf.mxu0
        %v409 = vadd.f32 %v211, %v408
        %v410 = vpop.f32.mrf.mxu0
        %411 = vmatprep.mubr.f32.mxu0 0.0
        %412 = vmatmul.mubr.f32.gmra.mxu0 %v168
        %v413 = vpop.f32.mrf.mxu0
        %v414 = vadd.f32 %v211, %v413
        %v415 = vpop.f32.mrf.mxu0
        %416 = vmatprep.mubr.f32.mxu0 0.0
        %417 = vmatmul.mubr.f32.gmra.mxu0 %v169
        %v418 = vpop.f32.mrf.mxu0
        %v419 = vadd.f32 %v211, %v418
        %v420 = vpop.f32.mrf.mxu0
        %421 = vmatprep.mubr.f32.mxu0 0.0
        %422 = vmatmul.mubr.f32.gmra.mxu0 %v170
        %v423 = vpop.f32.mrf.mxu0
        %v424 = vadd.f32 %v211, %v423
        %v425 = vpop.f32.mrf.mxu0
        %426 = vmatprep.mubr.f32.mxu0 0.0
        %427 = vmatmul.mubr.f32.gmra.mxu0 %v171
        %v428 = vpop.f32.mrf.mxu0
        %v429 = vadd.f32 %v211, %v428
        %v430 = vpop.f32.mrf.mxu0
        %431 = vmatprep.mubr.f32.mxu0 0.0
        %432 = vmatmul.mubr.f32.gmra.mxu0 %v172
        %v433 = vpop.f32.mrf.mxu0
        %v434 = vadd.f32 %v211, %v433
        %v435 = vpop.f32.mrf.mxu0
        %436 = vmatprep.mubr.f32.mxu0 0.0
        %437 = vmatmul.mubr.f32.gmra.mxu0 %v173
        %v438 = vpop.f32.mrf.mxu0
        %v439 = vadd.f32 %v211, %v438
        %v440 = vpop.f32.mrf.mxu0
        %441 = vmatprep.mubr.f32.mxu0 0.0
        %442 = vmatmul.mubr.f32.gmra.mxu0 %v174
        %v443 = vpop.f32.mrf.mxu0
        %v444 = vadd.f32 %v211, %v443
        %v445 = vpop.f32.mrf.mxu0
        %446 = vmatprep.mubr.f32.mxu0 0.0
        %447 = vmatmul.mubr.f32.gmra.mxu0 %v175
        %v448 = vpop.f32.mrf.mxu0
        %v449 = vadd.f32 %v211, %v448
        %v450 = vpop.f32.mrf.mxu0
        %451 = vmatprep.mubr.f32.mxu0 0.0
        %452 = vmatmul.mubr.f32.gmra.mxu0 %v176
        %v453 = vpop.f32.mrf.mxu0
        %v454 = vadd.f32 %v211, %v453
        %v455 = vpop.f32.mrf.mxu0
        %456 = vmatprep.mubr.f32.mxu0 0.0
        %457 = vmatmul.mubr.f32.gmra.mxu0 %v177
        %v458 = vpop.f32.mrf.mxu0
        %v459 = vadd.f32 %v211, %v458
        %v460 = vpop.f32.mrf.mxu0
        %461 = vmatprep.mubr.f32.mxu0 0.0
        %462 = vmatmul.mubr.f32.gmra.mxu0 %v178
        %v463 = vpop.f32.mrf.mxu0
        %v464 = vadd.f32 %v211, %v463
        %v465 = vpop.f32.mrf.mxu0
        %466 = vmatprep.mubr.f32.mxu0 0.0
        %467 = vmatmul.mubr.f32.gmra.mxu0 %v179
        %v468 = vpop.f32.mrf.mxu0
        %v469 = vadd.f32 %v211, %v468
        %v470 = vpop.f32.mrf.mxu0
        %471 = vmatprep.mubr.f32.mxu0 0.0
        %472 = vmatmul.mubr.f32.gmra.mxu0 %v180
        %v473 = vpop.f32.mrf.mxu0
        %v474 = vadd.f32 %v211, %v473
        %v475 = vpop.f32.mrf.mxu0
        %476 = vmatprep.mubr.f32.mxu0 0.0
        %477 = vmatmul.mubr.f32.gmra.mxu0 %v181
        %v478 = vpop.f32.mrf.mxu0
        %v479 = vadd.f32 %v211, %v478
        %v480 = vpop.f32.mrf.mxu0
        %481 = vmatprep.mubr.f32.mxu0 0.0
        %482 = vmatmul.mubr.f32.gmra.mxu0 %v182
        %v483 = vpop.f32.mrf.mxu0
        %v484 = vadd.f32 %v211, %v483
        %v485 = vpop.f32.mrf.mxu0
        %486 = vmatprep.mubr.f32.mxu0 0.0
        %487 = vmatmul.mubr.f32.gmra.mxu0 %v183
        %v488 = vpop.f32.mrf.mxu0
        %v489 = vadd.f32 %v211, %v488
        %v490 = vpop.f32.mrf.mxu0
        %491 = vmatprep.mubr.f32.mxu0 0.0
        %492 = vmatmul.mubr.f32.gmra.mxu0 %v184
        %v493 = vpop.f32.mrf.mxu0
        %v494 = vadd.f32 %v211, %v493
        %v495 = vpop.f32.mrf.mxu0
        %496 = vmatprep.mubr.f32.mxu0 0.0
        %497 = vmatmul.mubr.f32.gmra.mxu0 %v185
        %v498 = vpop.f32.mrf.mxu0
        %v499 = vadd.f32 %v211, %v498
        %v500 = vpop.f32.mrf.mxu0
        %501 = vmatprep.mubr.f32.mxu0 0.0
        %502 = vmatmul.mubr.f32.gmra.mxu0 %v186
        %v503 = vpop.f32.mrf.mxu0
        %v504 = vadd.f32 %v211, %v503
        %v505 = vpop.f32.mrf.mxu0
        %506 = vmatprep.mubr.f32.mxu0 0.0
        %507 = vmatmul.mubr.f32.gmra.mxu0 %v187
        %v508 = vpop.f32.mrf.mxu0
        %v509 = vadd.f32 %v211, %v508
        %v510 = vpop.f32.mrf.mxu0
        %511 = vmatprep.mubr.f32.mxu0 0.0
        %512 = vmatmul.mubr.f32.gmra.mxu0 %v188
        %v513 = vpop.f32.mrf.mxu0
        %v514 = vadd.f32 %v211, %v513
        %v515 = vpop.f32.mrf.mxu0
        %516 = vmatprep.mubr.f32.mxu0 0.0
        %517 = vmatmul.mubr.f32.gmra.mxu0 %v189
        %v518 = vpop.f32.mrf.mxu0
        %v519 = vadd.f32 %v211, %v518
        %v520 = vpop.f32.mrf.mxu0
        %521 = vmatprep.mubr.f32.mxu0 0.0
        %522 = vmatmul.mubr.f32.gmra.mxu0 %v190
        %v523 = vpop.f32.mrf.mxu0
        %v524 = vadd.f32 %v211, %v523
        %v525 = vpop.f32.mrf.mxu0
        %526 = vdwg.mxu0
        %v527 = vmax.f32 %v279, 0.0
        %v528 = vmax.f32 %v284, 0.0
        %v529 = vmax.f32 %v289, 0.0
        %v530 = vmax.f32 %v294, 0.0
        %v531 = vmax.f32 %v299, 0.0
        %v532 = vmax.f32 %v304, 0.0
        %v533 = vmax.f32 %v309, 0.0
        %v534 = vmax.f32 %v314, 0.0
        %v535 = vmax.f32 %v319, 0.0
        %v536 = vmax.f32 %v324, 0.0
        %v537 = vmax.f32 %v329, 0.0
        %v538 = vmax.f32 %v334, 0.0
        %v539 = vmax.f32 %v339, 0.0
        %v540 = vmax.f32 %v344, 0.0
        %v541 = vmax.f32 %v349, 0.0
        %v542 = vmax.f32 %v354, 0.0
        %v543 = vmax.f32 %v359, 0.0
        %v544 = vmax.f32 %v364, 0.0
        %v545 = vmax.f32 %v369, 0.0
        %v546 = vmax.f32 %v374, 0.0
        %v547 = vmax.f32 %v379, 0.0
        %v548 = vmax.f32 %v384, 0.0
        %v549 = vmax.f32 %v389, 0.0
        %v550 = vmax.f32 %v394, 0.0
        %v551 = vmax.f32 %v399, 0.0
        %v552 = vmax.f32 %v404, 0.0
        %v553 = vmax.f32 %v409, 0.0
        %v554 = vmax.f32 %v414, 0.0
        %v555 = vmax.f32 %v419, 0.0
        %v556 = vmax.f32 %v424, 0.0
        %v557 = vmax.f32 %v429, 0.0
        %v558 = vmax.f32 %v434, 0.0
        %v559 = vmax.f32 %v439, 0.0
        %v560 = vmax.f32 %v444, 0.0
        %v561 = vmax.f32 %v449, 0.0
        %v562 = vmax.f32 %v454, 0.0
        %v563 = vmax.f32 %v459, 0.0
        %v564 = vmax.f32 %v464, 0.0
        %v565 = vmax.f32 %v469, 0.0
        %v566 = vmax.f32 %v474, 0.0
        %v567 = vmax.f32 %v479, 0.0
        %v568 = vmax.f32 %v484, 0.0
        %v569 = vmax.f32 %v489, 0.0
        %v570 = vmax.f32 %v494, 0.0
        %v571 = vmax.f32 %v499, 0.0
        %v572 = vmax.f32 %v504, 0.0
        %v573 = vmax.f32 %v509, 0.0
        %v574 = vmax.f32 %v514, 0.0
        %v575 = vmax.f32 %v519, 0.0
        %v576 = vmax.f32 %v524, 0.0
        %vm627 = vcmask 1046528
        %v628 = vrot.slane %v527, 1
        %v629 = vrot.slane %v528, 1
        %v630 = vsel %vm627, %v628, %v629
        %v631 = vrot.slane %v529, 1
        %v632 = vsel %vm627, %v629, %v631
        %v633 = vrot.slane %v530, 1
        %v634 = vsel %vm627, %v631, %v633
        %v635 = vrot.slane %v531, 1
        %v636 = vsel %vm627, %v633, %v635
        %v637 = vrot.slane %v532, 1
        %v638 = vsel %vm627, %v635, %v637
        %v639 = vrot.slane %v533, 1
        %v640 = vsel %vm627, %v637, %v639
        %v641 = vrot.slane %v534, 1
        %v642 = vsel %vm627, %v639, %v641
        %v643 = vrot.slane %v535, 1
        %v644 = vsel %vm627, %v641, %v643
        %v645 = vrot.slane %v536, 1
        %v646 = vsel %vm627, %v643, %v645
        %v647 = vrot.slane %v537, 1
        %v648 = vsel %vm627, %v645, %v647
        %v649 = vrot.slane %v538, 1
        %v650 = vsel %vm627, %v647, %v649
        %v651 = vrot.slane %v539, 1
        %v652 = vsel %vm627, %v649, %v651
        %v653 = vrot.slane %v540, 1
        %v654 = vsel %vm627, %v651, %v653
        %v655 = vrot.slane %v541, 1
        %v656 = vsel %vm627, %v653, %v655
        %v657 = vrot.slane %v542, 1
        %v658 = vsel %vm627, %v655, %v657
        %v659 = vrot.slane %v543, 1
        %v660 = vsel %vm627, %v657, %v659
        %v661 = vrot.slane %v544, 1
        %v662 = vsel %vm627, %v659, %v661
        %v663 = vrot.slane %v545, 1
        %v664 = vsel %vm627, %v661, %v663
        %v665 = vrot.slane %v546, 1
        %v666 = vsel %vm627, %v663, %v665
        %v667 = vrot.slane %v547, 1
        %v668 = vsel %vm627, %v665, %v667
        %v669 = vrot.slane %v548, 1
        %v670 = vsel %vm627, %v667, %v669
        %v671 = vrot.slane %v549, 1
        %v672 = vsel %vm627, %v669, %v671
        %v673 = vrot.slane %v550, 1
        %v674 = vsel %vm627, %v671, %v673
        %v675 = vrot.slane %v551, 1
        %v676 = vsel %vm627, %v673, %v675
        %v677 = vrot.slane %v552, 1
        %v678 = vsel %vm627, %v675, %v677
        %v679 = vrot.slane %v553, 1
        %v680 = vsel %vm627, %v677, %v679
        %v681 = vrot.slane %v554, 1
        %v682 = vsel %vm627, %v679, %v681
        %v683 = vrot.slane %v555, 1
        %v684 = vsel %vm627, %v681, %v683
        %v685 = vrot.slane %v556, 1
        %v686 = vsel %vm627, %v683, %v685
        %v687 = vrot.slane %v557, 1
        %v688 = vsel %vm627, %v685, %v687
        %v689 = vrot.slane %v558, 1
        %v690 = vsel %vm627, %v687, %v689
        %v691 = vrot.slane %v559, 1
        %v692 = vsel %vm627, %v689, %v691
        %v693 = vrot.slane %v560, 1
        %v694 = vsel %vm627, %v691, %v693
        %v695 = vrot.slane %v561, 1
        %v696 = vsel %vm627, %v693, %v695
        %v697 = vrot.slane %v562, 1
        %v698 = vsel %vm627, %v695, %v697
        %v699 = vrot.slane %v563, 1
        %v700 = vsel %vm627, %v697, %v699
        %v701 = vrot.slane %v564, 1
        %v702 = vsel %vm627, %v699, %v701
        %v703 = vrot.slane %v565, 1
        %v704 = vsel %vm627, %v701, %v703
        %v705 = vrot.slane %v566, 1
        %v706 = vsel %vm627, %v703, %v705
        %v707 = vrot.slane %v567, 1
        %v708 = vsel %vm627, %v705, %v707
        %v709 = vrot.slane %v568, 1
        %v710 = vsel %vm627, %v707, %v709
        %v711 = vrot.slane %v569, 1
        %v712 = vsel %vm627, %v709, %v711
        %v713 = vrot.slane %v570, 1
        %v714 = vsel %vm627, %v711, %v713
        %v715 = vrot.slane %v571, 1
        %v716 = vsel %vm627, %v713, %v715
        %v717 = vrot.slane %v572, 1
        %v718 = vsel %vm627, %v715, %v717
        %v719 = vrot.slane %v573, 1
        %v720 = vsel %vm627, %v717, %v719
        %v721 = vrot.slane %v574, 1
        %v722 = vsel %vm627, %v719, %v721
        %v723 = vrot.slane %v575, 1
        %v724 = vsel %vm627, %v721, %v723
        %v725 = vrot.slane %v576, 1
        %v726 = vsel %vm627, %v723, %v725
        %v776 = vmax.f32 %v527, %v630
        %v777 = vmax.f32 %v528, %v632
        %v778 = vmax.f32 %v529, %v634
        %v779 = vmax.f32 %v530, %v636
        %v780 = vmax.f32 %v531, %v638
        %v781 = vmax.f32 %v532, %v640
        %v782 = vmax.f32 %v533, %v642
        %v783 = vmax.f32 %v534, %v644
        %v784 = vmax.f32 %v535, %v646
        %v785 = vmax.f32 %v536, %v648
        %v786 = vmax.f32 %v537, %v650
        %v787 = vmax.f32 %v538, %v652
        %v788 = vmax.f32 %v539, %v654
        %v789 = vmax.f32 %v540, %v656
        %v790 = vmax.f32 %v541, %v658
        %v791 = vmax.f32 %v542, %v660
        %v792 = vmax.f32 %v543, %v662
        %v793 = vmax.f32 %v544, %v664
        %v794 = vmax.f32 %v545, %v666
        %v795 = vmax.f32 %v546, %v668
        %v796 = vmax.f32 %v547, %v670
        %v797 = vmax.f32 %v548, %v672
        %v798 = vmax.f32 %v549, %v674
        %v799 = vmax.f32 %v550, %v676
        %v800 = vmax.f32 %v551, %v678
        %v801 = vmax.f32 %v552, %v680
        %v802 = vmax.f32 %v553, %v682
        %v803 = vmax.f32 %v554, %v684
        %v804 = vmax.f32 %v555, %v686
        %v805 = vmax.f32 %v556, %v688
        %v806 = vmax.f32 %v557, %v690
        %v807 = vmax.f32 %v558, %v692
        %v808 = vmax.f32 %v559, %v694
        %v809 = vmax.f32 %v560, %v696
        %v810 = vmax.f32 %v561, %v698
        %v811 = vmax.f32 %v562, %v700
        %v812 = vmax.f32 %v563, %v702
        %v813 = vmax.f32 %v564, %v704
        %v814 = vmax.f32 %v565, %v706
        %v815 = vmax.f32 %v566, %v708
        %v816 = vmax.f32 %v567, %v710
        %v817 = vmax.f32 %v568, %v712
        %v818 = vmax.f32 %v569, %v714
        %v819 = vmax.f32 %v570, %v716
        %v820 = vmax.f32 %v571, %v718
        %v821 = vmax.f32 %v572, %v720
        %v822 = vmax.f32 %v573, %v722
        %v823 = vmax.f32 %v574, %v724
        %v824 = vmax.f32 %v575, %v726
        %v825 = vmax.f32 %v776, %v780
        %v826 = vmax.f32 %v777, %v781
        %v827 = vmax.f32 %v778, %v782
        %v828 = vmax.f32 %v779, %v783
        %v829 = vmax.f32 %v780, %v784
        %v830 = vmax.f32 %v781, %v785
        %v831 = vmax.f32 %v782, %v786
        %v832 = vmax.f32 %v783, %v787
        %v833 = vmax.f32 %v784, %v788
        %v834 = vmax.f32 %v785, %v789
        %v835 = vmax.f32 %v786, %v790
        %v836 = vmax.f32 %v787, %v791
        %v837 = vmax.f32 %v788, %v792
        %v838 = vmax.f32 %v789, %v793
        %v839 = vmax.f32 %v790, %v794
        %v840 = vmax.f32 %v791, %v795
        %v841 = vmax.f32 %v792, %v796
        %v842 = vmax.f32 %v793, %v797
        %v843 = vmax.f32 %v794, %v798
        %v844 = vmax.f32 %v795, %v799
        %v845 = vmax.f32 %v796, %v800
        %v846 = vmax.f32 %v797, %v801
        %v847 = vmax.f32 %v798, %v802
        %v848 = vmax.f32 %v799, %v803
        %v849 = vmax.f32 %v800, %v804
        %v850 = vmax.f32 %v801, %v805
        %v851 = vmax.f32 %v802, %v806
        %v852 = vmax.f32 %v803, %v807
        %v853 = vmax.f32 %v804, %v808
        %v854 = vmax.f32 %v805, %v809
        %v855 = vmax.f32 %v806, %v810
        %v856 = vmax.f32 %v807, %v811
        %v857 = vmax.f32 %v808, %v812
        %v858 = vmax.f32 %v809, %v813
        %v859 = vmax.f32 %v810, %v814
        %v860 = vmax.f32 %v811, %v815
        %v861 = vmax.f32 %v812, %v816
        %v862 = vmax.f32 %v813, %v817
        %v863 = vmax.f32 %v814, %v818
        %v864 = vmax.f32 %v815, %v819
        %v865 = vmax.f32 %v816, %v820
        %v866 = vmax.f32 %v817, %v821
        %v867 = vmax.f32 %v818, %v822
        %v868 = vmax.f32 %v819, %v823
        %v869 = vmax.f32 %v820, %v824
        %vm915 = vcmask 1045504
        %v916 = vrot.slane %v825, 2
        %v917 = vrot.slane %v826, 2
        %v918 = vsel %vm915, %v916, %v917
        %v919 = vrot.slane %v827, 2
        %v920 = vsel %vm915, %v917, %v919
        %v921 = vrot.slane %v828, 2
        %v922 = vsel %vm915, %v919, %v921
        %v923 = vrot.slane %v829, 2
        %v924 = vsel %vm915, %v921, %v923
        %v925 = vrot.slane %v830, 2
        %v926 = vsel %vm915, %v923, %v925
        %v927 = vrot.slane %v831, 2
        %v928 = vsel %vm915, %v925, %v927
        %v929 = vrot.slane %v832, 2
        %v930 = vsel %vm915, %v927, %v929
        %v931 = vrot.slane %v833, 2
        %v932 = vsel %vm915, %v929, %v931
        %v933 = vrot.slane %v834, 2
        %v934 = vsel %vm915, %v931, %v933
        %v935 = vrot.slane %v835, 2
        %v936 = vsel %vm915, %v933, %v935
        %v937 = vrot.slane %v836, 2
        %v938 = vsel %vm915, %v935, %v937
        %v939 = vrot.slane %v837, 2
        %v940 = vsel %vm915, %v937, %v939
        %v941 = vrot.slane %v838, 2
        %v942 = vsel %vm915, %v939, %v941
        %v943 = vrot.slane %v839, 2
        %v944 = vsel %vm915, %v941, %v943
        %v945 = vrot.slane %v840, 2
        %v946 = vsel %vm915, %v943, %v945
        %v947 = vrot.slane %v841, 2
        %v948 = vsel %vm915, %v945, %v947
        %v949 = vrot.slane %v842, 2
        %v950 = vsel %vm915, %v947, %v949
        %v951 = vrot.slane %v843, 2
        %v952 = vsel %vm915, %v949, %v951
        %v953 = vrot.slane %v844, 2
        %v954 = vsel %vm915, %v951, %v953
        %v955 = vrot.slane %v845, 2
        %v956 = vsel %vm915, %v953, %v955
        %v957 = vrot.slane %v846, 2
        %v958 = vsel %vm915, %v955, %v957
        %v959 = vrot.slane %v847, 2
        %v960 = vsel %vm915, %v957, %v959
        %v961 = vrot.slane %v848, 2
        %v962 = vsel %vm915, %v959, %v961
        %v963 = vrot.slane %v849, 2
        %v964 = vsel %vm915, %v961, %v963
        %v965 = vrot.slane %v850, 2
        %v966 = vsel %vm915, %v963, %v965
        %v967 = vrot.slane %v851, 2
        %v968 = vsel %vm915, %v965, %v967
        %v969 = vrot.slane %v852, 2
        %v970 = vsel %vm915, %v967, %v969
        %v971 = vrot.slane %v853, 2
        %v972 = vsel %vm915, %v969, %v971
        %v973 = vrot.slane %v854, 2
        %v974 = vsel %vm915, %v971, %v973
        %v975 = vrot.slane %v855, 2
        %v976 = vsel %vm915, %v973, %v975
        %v977 = vrot.slane %v856, 2
        %v978 = vsel %vm915, %v975, %v977
        %v979 = vrot.slane %v857, 2
        %v980 = vsel %vm915, %v977, %v979
        %v981 = vrot.slane %v858, 2
        %v982 = vsel %vm915, %v979, %v981
        %v983 = vrot.slane %v859, 2
        %v984 = vsel %vm915, %v981, %v983
        %v985 = vrot.slane %v860, 2
        %v986 = vsel %vm915, %v983, %v985
        %v987 = vrot.slane %v861, 2
        %v988 = vsel %vm915, %v985, %v987
        %v989 = vrot.slane %v862, 2
        %v990 = vsel %vm915, %v987, %v989
        %v991 = vrot.slane %v863, 2
        %v992 = vsel %vm915, %v989, %v991
        %v993 = vrot.slane %v864, 2
        %v994 = vsel %vm915, %v991, %v993
        %v995 = vrot.slane %v865, 2
        %v996 = vsel %vm915, %v993, %v995
        %v997 = vrot.slane %v866, 2
        %v998 = vsel %vm915, %v995, %v997
        %v999 = vrot.slane %v867, 2
        %v1000 = vsel %vm915, %v997, %v999
        %v1001 = vrot.slane %v868, 2
        %v1002 = vsel %vm915, %v999, %v1001
        %v1003 = vrot.slane %v869, 2
        %v1004 = vsel %vm915, %v1001, %v1003
        %1005 = vrot.lane.b32.xlu0 %v918, 6
        %v1006 = vpop.permute.xlu0 %1005
        %1007 = vrot.lane.b32.xlu0 %v920, 6
        %v1008 = vpop.permute.xlu0 %1007
        %1009 = vrot.lane.b32.xlu0 %v922, 6
        %v1010 = vpop.permute.xlu0 %1009
        %1011 = vrot.lane.b32.xlu0 %v924, 6
        %v1012 = vpop.permute.xlu0 %1011
        %1013 = vrot.lane.b32.xlu0 %v926, 6
        %v1014 = vpop.permute.xlu0 %1013
        %1015 = vrot.lane.b32.xlu0 %v928, 6
        %v1016 = vpop.permute.xlu0 %1015
        %1017 = vrot.lane.b32.xlu0 %v930, 6
        %v1018 = vpop.permute.xlu0 %1017
        %1019 = vrot.lane.b32.xlu0 %v932, 6
        %v1020 = vpop.permute.xlu0 %1019
        %1021 = vrot.lane.b32.xlu0 %v934, 6
        %v1022 = vpop.permute.xlu0 %1021
        %1023 = vrot.lane.b32.xlu0 %v936, 6
        %v1024 = vpop.permute.xlu0 %1023
        %1025 = vrot.lane.b32.xlu0 %v938, 6
        %v1026 = vpop.permute.xlu0 %1025
        %1027 = vrot.lane.b32.xlu0 %v940, 6
        %v1028 = vpop.permute.xlu0 %1027
        %1029 = vrot.lane.b32.xlu0 %v942, 6
        %v1030 = vpop.permute.xlu0 %1029
        %1031 = vrot.lane.b32.xlu0 %v944, 6
        %v1032 = vpop.permute.xlu0 %1031
        %1033 = vrot.lane.b32.xlu0 %v946, 6
        %v1034 = vpop.permute.xlu0 %1033
        %1035 = vrot.lane.b32.xlu0 %v948, 6
        %v1036 = vpop.permute.xlu0 %1035
        %1037 = vrot.lane.b32.xlu0 %v950, 6
        %v1038 = vpop.permute.xlu0 %1037
        %1039 = vrot.lane.b32.xlu0 %v952, 6
        %v1040 = vpop.permute.xlu0 %1039
        %1041 = vrot.lane.b32.xlu0 %v954, 6
        %v1042 = vpop.permute.xlu0 %1041
        %1043 = vrot.lane.b32.xlu0 %v956, 6
        %v1044 = vpop.permute.xlu0 %1043
        %1045 = vrot.lane.b32.xlu0 %v958, 6
        %v1046 = vpop.permute.xlu0 %1045
        %1047 = vrot.lane.b32.xlu0 %v960, 6
        %v1048 = vpop.permute.xlu0 %1047
        %1049 = vrot.lane.b32.xlu0 %v962, 6
        %v1050 = vpop.permute.xlu0 %1049
        %1051 = vrot.lane.b32.xlu0 %v964, 6
        %v1052 = vpop.permute.xlu0 %1051
        %1053 = vrot.lane.b32.xlu0 %v966, 6
        %v1054 = vpop.permute.xlu0 %1053
        %1055 = vrot.lane.b32.xlu0 %v968, 6
        %v1056 = vpop.permute.xlu0 %1055
        %1057 = vrot.lane.b32.xlu0 %v970, 6
        %v1058 = vpop.permute.xlu0 %1057
        %1059 = vrot.lane.b32.xlu0 %v972, 6
        %v1060 = vpop.permute.xlu0 %1059
        %1061 = vrot.lane.b32.xlu0 %v974, 6
        %v1062 = vpop.permute.xlu0 %1061
        %1063 = vrot.lane.b32.xlu0 %v976, 6
        %v1064 = vpop.permute.xlu0 %1063
        %1065 = vrot.lane.b32.xlu0 %v978, 6
        %v1066 = vpop.permute.xlu0 %1065
        %1067 = vrot.lane.b32.xlu0 %v980, 6
        %v1068 = vpop.permute.xlu0 %1067
        %1069 = vrot.lane.b32.xlu0 %v982, 6
        %v1070 = vpop.permute.xlu0 %1069
        %1071 = vrot.lane.b32.xlu0 %v984, 6
        %v1072 = vpop.permute.xlu0 %1071
        %1073 = vrot.lane.b32.xlu0 %v986, 6
        %v1074 = vpop.permute.xlu0 %1073
        %1075 = vrot.lane.b32.xlu0 %v988, 6
        %v1076 = vpop.permute.xlu0 %1075
        %1077 = vrot.lane.b32.xlu0 %v990, 6
        %v1078 = vpop.permute.xlu0 %1077
        %1079 = vrot.lane.b32.xlu0 %v992, 6
        %v1080 = vpop.permute.xlu0 %1079
        %1081 = vrot.lane.b32.xlu0 %v994, 6
        %v1082 = vpop.permute.xlu0 %1081
        %1083 = vrot.lane.b32.xlu0 %v996, 6
        %v1084 = vpop.permute.xlu0 %1083
        %1085 = vrot.lane.b32.xlu0 %v998, 6
        %v1086 = vpop.permute.xlu0 %1085
        %1087 = vrot.lane.b32.xlu0 %v1000, 6
        %v1088 = vpop.permute.xlu0 %1087
        %1089 = vrot.lane.b32.xlu0 %v1002, 6
        %v1090 = vpop.permute.xlu0 %1089
        %1091 = vrot.lane.b32.xlu0 %v1004, 6
        %v1092 = vpop.permute.xlu0 %1091
        %vm1137 = vcmask 1043456
        %v1138 = vrot.slane %v825, 4
        %v1139 = vrot.slane %v826, 4
        %v1140 = vsel %vm1137, %v1138, %v1139
        %v1141 = vrot.slane %v827, 4
        %v1142 = vsel %vm1137, %v1139, %v1141
        %v1143 = vrot.slane %v828, 4
        %v1144 = vsel %vm1137, %v1141, %v1143
        %v1145 = vrot.slane %v829, 4
        %v1146 = vsel %vm1137, %v1143, %v1145
        %v1147 = vrot.slane %v830, 4
        %v1148 = vsel %vm1137, %v1145, %v1147
        %v1149 = vrot.slane %v831, 4
        %v1150 = vsel %vm1137, %v1147, %v1149
        %v1151 = vrot.slane %v832, 4
        %v1152 = vsel %vm1137, %v1149, %v1151
        %v1153 = vrot.slane %v833, 4
        %v1154 = vsel %vm1137, %v1151, %v1153
        %v1155 = vrot.slane %v834, 4
        %v1156 = vsel %vm1137, %v1153, %v1155
        %v1157 = vrot.slane %v835, 4
        %v1158 = vsel %vm1137, %v1155, %v1157
        %v1159 = vrot.slane %v836, 4
        %v1160 = vsel %vm1137, %v1157, %v1159
        %v1161 = vrot.slane %v837, 4
        %v1162 = vsel %vm1137, %v1159, %v1161
        %v1163 = vrot.slane %v838, 4
        %v1164 = vsel %vm1137, %v1161, %v1163
        %v1165 = vrot.slane %v839, 4
        %v1166 = vsel %vm1137, %v1163, %v1165
        %v1167 = vrot.slane %v840, 4
        %v1168 = vsel %vm1137, %v1165, %v1167
        %v1169 = vrot.slane %v841, 4
        %v1170 = vsel %vm1137, %v1167, %v1169
        %v1171 = vrot.slane %v842, 4
        %v1172 = vsel %vm1137, %v1169, %v1171
        %v1173 = vrot.slane %v843, 4
        %v1174 = vsel %vm1137, %v1171, %v1173
        %v1175 = vrot.slane %v844, 4
        %v1176 = vsel %vm1137, %v1173, %v1175
        %v1177 = vrot.slane %v845, 4
        %v1178 = vsel %vm1137, %v1175, %v1177
        %v1179 = vrot.slane %v846, 4
        %v1180 = vsel %vm1137, %v1177, %v1179
        %v1181 = vrot.slane %v847, 4
        %v1182 = vsel %vm1137, %v1179, %v1181
        %v1183 = vrot.slane %v848, 4
        %v1184 = vsel %vm1137, %v1181, %v1183
        %v1185 = vrot.slane %v849, 4
        %v1186 = vsel %vm1137, %v1183, %v1185
        %v1187 = vrot.slane %v850, 4
        %v1188 = vsel %vm1137, %v1185, %v1187
        %v1189 = vrot.slane %v851, 4
        %v1190 = vsel %vm1137, %v1187, %v1189
        %v1191 = vrot.slane %v852, 4
        %v1192 = vsel %vm1137, %v1189, %v1191
        %v1193 = vrot.slane %v853, 4
        %v1194 = vsel %vm1137, %v1191, %v1193
        %v1195 = vrot.slane %v854, 4
        %v1196 = vsel %vm1137, %v1193, %v1195
        %v1197 = vrot.slane %v855, 4
        %v1198 = vsel %vm1137, %v1195, %v1197
        %v1199 = vrot.slane %v856, 4
        %v1200 = vsel %vm1137, %v1197, %v1199
        %v1201 = vrot.slane %v857, 4
        %v1202 = vsel %vm1137, %v1199, %v1201
        %v1203 = vrot.slane %v858, 4
        %v1204 = vsel %vm1137, %v1201, %v1203
        %v1205 = vrot.slane %v859, 4
        %v1206 = vsel %vm1137, %v1203, %v1205
        %v1207 = vrot.slane %v860, 4
        %v1208 = vsel %vm1137, %v1205, %v1207
        %v1209 = vrot.slane %v861, 4
        %v1210 = vsel %vm1137, %v1207, %v1209
        %v1211 = vrot.slane %v862, 4
        %v1212 = vsel %vm1137, %v1209, %v1211
        %v1213 = vrot.slane %v863, 4
        %v1214 = vsel %vm1137, %v1211, %v1213
        %v1215 = vrot.slane %v864, 4
        %v1216 = vsel %vm1137, %v1213, %v1215
        %v1217 = vrot.slane %v865, 4
        %v1218 = vsel %vm1137, %v1215, %v1217
        %v1219 = vrot.slane %v866, 4
        %v1220 = vsel %vm1137, %v1217, %v1219
        %v1221 = vrot.slane %v867, 4
        %v1222 = vsel %vm1137, %v1219, %v1221
        %v1223 = vrot.slane %v868, 4
        %v1224 = vsel %vm1137, %v1221, %v1223
        %v1225 = vrot.slane %v869, 4
        %v1226 = vsel %vm1137, %v1223, %v1225
        %1227 = vrot.lane.b32.xlu0 %v1140, 12
        %v1228 = vpop.permute.xlu0 %1227
        %1229 = vrot.lane.b32.xlu0 %v1142, 12
        %v1230 = vpop.permute.xlu0 %1229
        %1231 = vrot.lane.b32.xlu0 %v1144, 12
        %v1232 = vpop.permute.xlu0 %1231
        %1233 = vrot.lane.b32.xlu0 %v1146, 12
        %v1234 = vpop.permute.xlu0 %1233
        %1235 = vrot.lane.b32.xlu0 %v1148, 12
        %v1236 = vpop.permute.xlu0 %1235
        %1237 = vrot.lane.b32.xlu0 %v1150, 12
        %v1238 = vpop.permute.xlu0 %1237
        %1239 = vrot.lane.b32.xlu0 %v1152, 12
        %v1240 = vpop.permute.xlu0 %1239
        %1241 = vrot.lane.b32.xlu0 %v1154, 12
        %v1242 = vpop.permute.xlu0 %1241
        %1243 = vrot.lane.b32.xlu0 %v1156, 12
        %v1244 = vpop.permute.xlu0 %1243
        %1245 = vrot.lane.b32.xlu0 %v1158, 12
        %v1246 = vpop.permute.xlu0 %1245
        %1247 = vrot.lane.b32.xlu0 %v1160, 12
        %v1248 = vpop.permute.xlu0 %1247
        %1249 = vrot.lane.b32.xlu0 %v1162, 12
        %v1250 = vpop.permute.xlu0 %1249
        %1251 = vrot.lane.b32.xlu0 %v1164, 12
        %v1252 = vpop.permute.xlu0 %1251
        %1253 = vrot.lane.b32.xlu0 %v1166, 12
        %v1254 = vpop.permute.xlu0 %1253
        %1255 = vrot.lane.b32.xlu0 %v1168, 12
        %v1256 = vpop.permute.xlu0 %1255
        %1257 = vrot.lane.b32.xlu0 %v1170, 12
        %v1258 = vpop.permute.xlu0 %1257
        %1259 = vrot.lane.b32.xlu0 %v1172, 12
        %v1260 = vpop.permute.xlu0 %1259
        %1261 = vrot.lane.b32.xlu0 %v1174, 12
        %v1262 = vpop.permute.xlu0 %1261
        %1263 = vrot.lane.b32.xlu0 %v1176, 12
        %v1264 = vpop.permute.xlu0 %1263
        %1265 = vrot.lane.b32.xlu0 %v1178, 12
        %v1266 = vpop.permute.xlu0 %1265
        %1267 = vrot.lane.b32.xlu0 %v1180, 12
        %v1268 = vpop.permute.xlu0 %1267
        %1269 = vrot.lane.b32.xlu0 %v1182, 12
        %v1270 = vpop.permute.xlu0 %1269
        %1271 = vrot.lane.b32.xlu0 %v1184, 12
        %v1272 = vpop.permute.xlu0 %1271
        %1273 = vrot.lane.b32.xlu0 %v1186, 12
        %v1274 = vpop.permute.xlu0 %1273
        %1275 = vrot.lane.b32.xlu0 %v1188, 12
        %v1276 = vpop.permute.xlu0 %1275
        %1277 = vrot.lane.b32.xlu0 %v1190, 12
        %v1278 = vpop.permute.xlu0 %1277
        %1279 = vrot.lane.b32.xlu0 %v1192, 12
        %v1280 = vpop.permute.xlu0 %1279
        %1281 = vrot.lane.b32.xlu0 %v1194, 12
        %v1282 = vpop.permute.xlu0 %1281
        %1283 = vrot.lane.b32.xlu0 %v1196, 12
        %v1284 = vpop.permute.xlu0 %1283
        %1285 = vrot.lane.b32.xlu0 %v1198, 12
        %v1286 = vpop.permute.xlu0 %1285
        %1287 = vrot.lane.b32.xlu0 %v1200, 12
        %v1288 = vpop.permute.xlu0 %1287
        %1289 = vrot.lane.b32.xlu0 %v1202, 12
        %v1290 = vpop.permute.xlu0 %1289
        %1291 = vrot.lane.b32.xlu0 %v1204, 12
        %v1292 = vpop.permute.xlu0 %1291
        %1293 = vrot.lane.b32.xlu0 %v1206, 12
        %v1294 = vpop.permute.xlu0 %1293
        %1295 = vrot.lane.b32.xlu0 %v1208, 12
        %v1296 = vpop.permute.xlu0 %1295
        %1297 = vrot.lane.b32.xlu0 %v1210, 12
        %v1298 = vpop.permute.xlu0 %1297
        %1299 = vrot.lane.b32.xlu0 %v1212, 12
        %v1300 = vpop.permute.xlu0 %1299
        %1301 = vrot.lane.b32.xlu0 %v1214, 12
        %v1302 = vpop.permute.xlu0 %1301
        %1303 = vrot.lane.b32.xlu0 %v1216, 12
        %v1304 = vpop.permute.xlu0 %1303
        %1305 = vrot.lane.b32.xlu0 %v1218, 12
        %v1306 = vpop.permute.xlu0 %1305
        %1307 = vrot.lane.b32.xlu0 %v1220, 12
        %v1308 = vpop.permute.xlu0 %1307
        %1309 = vrot.lane.b32.xlu0 %v1222, 12
        %v1310 = vpop.permute.xlu0 %1309
        %1311 = vrot.lane.b32.xlu0 %v1224, 12
        %v1312 = vpop.permute.xlu0 %1311
        %1313 = vrot.lane.b32.xlu0 %v1226, 12
        %v1314 = vpop.permute.xlu0 %1313
        %vm1359 = vcmask 1041408
        %v1360 = vrot.slane %v825, 6
        %v1361 = vrot.slane %v826, 6
        %v1362 = vsel %vm1359, %v1360, %v1361
        %v1363 = vrot.slane %v827, 6
        %v1364 = vsel %vm1359, %v1361, %v1363
        %v1365 = vrot.slane %v828, 6
        %v1366 = vsel %vm1359, %v1363, %v1365
        %v1367 = vrot.slane %v829, 6
        %v1368 = vsel %vm1359, %v1365, %v1367
        %v1369 = vrot.slane %v830, 6
        %v1370 = vsel %vm1359, %v1367, %v1369
        %v1371 = vrot.slane %v831, 6
        %v1372 = vsel %vm1359, %v1369, %v1371
        %v1373 = vrot.slane %v832, 6
        %v1374 = vsel %vm1359, %v1371, %v1373
        %v1375 = vrot.slane %v833, 6
        %v1376 = vsel %vm1359, %v1373, %v1375
        %v1377 = vrot.slane %v834, 6
        %v1378 = vsel %vm1359, %v1375, %v1377
        %v1379 = vrot.slane %v835, 6
        %v1380 = vsel %vm1359, %v1377, %v1379
        %v1381 = vrot.slane %v836, 6
        %v1382 = vsel %vm1359, %v1379, %v1381
        %v1383 = vrot.slane %v837, 6
        %v1384 = vsel %vm1359, %v1381, %v1383
        %v1385 = vrot.slane %v838, 6
        %v1386 = vsel %vm1359, %v1383, %v1385
        %v1387 = vrot.slane %v839, 6
        %v1388 = vsel %vm1359, %v1385, %v1387
        %v1389 = vrot.slane %v840, 6
        %v1390 = vsel %vm1359, %v1387, %v1389
        %v1391 = vrot.slane %v841, 6
        %v1392 = vsel %vm1359, %v1389, %v1391
        %v1393 = vrot.slane %v842, 6
        %v1394 = vsel %vm1359, %v1391, %v1393
        %v1395 = vrot.slane %v843, 6
        %v1396 = vsel %vm1359, %v1393, %v1395
        %v1397 = vrot.slane %v844, 6
        %v1398 = vsel %vm1359, %v1395, %v1397
        %v1399 = vrot.slane %v845, 6
        %v1400 = vsel %vm1359, %v1397, %v1399
        %v1401 = vrot.slane %v846, 6
        %v1402 = vsel %vm1359, %v1399, %v1401
        %v1403 = vrot.slane %v847, 6
        %v1404 = vsel %vm1359, %v1401, %v1403
        %v1405 = vrot.slane %v848, 6
        %v1406 = vsel %vm1359, %v1403, %v1405
        %v1407 = vrot.slane %v849, 6
        %v1408 = vsel %vm1359, %v1405, %v1407
        %v1409 = vrot.slane %v850, 6
        %v1410 = vsel %vm1359, %v1407, %v1409
        %v1411 = vrot.slane %v851, 6
        %v1412 = vsel %vm1359, %v1409, %v1411
        %v1413 = vrot.slane %v852, 6
        %v1414 = vsel %vm1359, %v1411, %v1413
        %v1415 = vrot.slane %v853, 6
        %v1416 = vsel %vm1359, %v1413, %v1415
        %v1417 = vrot.slane %v854, 6
        %v1418 = vsel %vm1359, %v1415, %v1417
        %v1419 = vrot.slane %v855, 6
        %v1420 = vsel %vm1359, %v1417, %v1419
        %v1421 = vrot.slane %v856, 6
        %v1422 = vsel %vm1359, %v1419, %v1421
        %v1423 = vrot.slane %v857, 6
        %v1424 = vsel %vm1359, %v1421, %v1423
        %v1425 = vrot.slane %v858, 6
        %v1426 = vsel %vm1359, %v1423, %v1425
        %v1427 = vrot.slane %v859, 6
        %v1428 = vsel %vm1359, %v1425, %v1427
        %v1429 = vrot.slane %v860, 6
        %v1430 = vsel %vm1359, %v1427, %v1429
        %v1431 = vrot.slane %v861, 6
        %v1432 = vsel %vm1359, %v1429, %v1431
        %v1433 = vrot.slane %v862, 6
        %v1434 = vsel %vm1359, %v1431, %v1433
        %v1435 = vrot.slane %v863, 6
        %v1436 = vsel %vm1359, %v1433, %v1435
        %v1437 = vrot.slane %v864, 6
        %v1438 = vsel %vm1359, %v1435, %v1437
        %v1439 = vrot.slane %v865, 6
        %v1440 = vsel %vm1359, %v1437, %v1439
        %v1441 = vrot.slane %v866, 6
        %v1442 = vsel %vm1359, %v1439, %v1441
        %v1443 = vrot.slane %v867, 6
        %v1444 = vsel %vm1359, %v1441, %v1443
        %v1445 = vrot.slane %v868, 6
        %v1446 = vsel %vm1359, %v1443, %v1445
        %v1447 = vrot.slane %v869, 6
        %v1448 = vsel %vm1359, %v1445, %v1447
        %1449 = vrot.lane.b32.xlu0 %v1362, 18
        %v1450 = vpop.permute.xlu0 %1449
        %1451 = vrot.lane.b32.xlu0 %v1364, 18
        %v1452 = vpop.permute.xlu0 %1451
        %1453 = vrot.lane.b32.xlu0 %v1366, 18
        %v1454 = vpop.permute.xlu0 %1453
        %1455 = vrot.lane.b32.xlu0 %v1368, 18
        %v1456 = vpop.permute.xlu0 %1455
        %1457 = vrot.lane.b32.xlu0 %v1370, 18
        %v1458 = vpop.permute.xlu0 %1457
        %1459 = vrot.lane.b32.xlu0 %v1372, 18
        %v1460 = vpop.permute.xlu0 %1459
        %1461 = vrot.lane.b32.xlu0 %v1374, 18
        %v1462 = vpop.permute.xlu0 %1461
        %1463 = vrot.lane.b32.xlu0 %v1376, 18
        %v1464 = vpop.permute.xlu0 %1463
        %1465 = vrot.lane.b32.xlu0 %v1378, 18
        %v1466 = vpop.permute.xlu0 %1465
        %1467 = vrot.lane.b32.xlu0 %v1380, 18
        %v1468 = vpop.permute.xlu0 %1467
        %1469 = vrot.lane.b32.xlu0 %v1382, 18
        %v1470 = vpop.permute.xlu0 %1469
        %1471 = vrot.lane.b32.xlu0 %v1384, 18
        %v1472 = vpop.permute.xlu0 %1471
        %1473 = vrot.lane.b32.xlu0 %v1386, 18
        %v1474 = vpop.permute.xlu0 %1473
        %1475 = vrot.lane.b32.xlu0 %v1388, 18
        %v1476 = vpop.permute.xlu0 %1475
        %1477 = vrot.lane.b32.xlu0 %v1390, 18
        %v1478 = vpop.permute.xlu0 %1477
        %1479 = vrot.lane.b32.xlu0 %v1392, 18
        %v1480 = vpop.permute.xlu0 %1479
        %1481 = vrot.lane.b32.xlu0 %v1394, 18
        %v1482 = vpop.permute.xlu0 %1481
        %1483 = vrot.lane.b32.xlu0 %v1396, 18
        %v1484 = vpop.permute.xlu0 %1483
        %1485 = vrot.lane.b32.xlu0 %v1398, 18
        %v1486 = vpop.permute.xlu0 %1485
        %1487 = vrot.lane.b32.xlu0 %v1400, 18
        %v1488 = vpop.permute.xlu0 %1487
        %1489 = vrot.lane.b32.xlu0 %v1402, 18
        %v1490 = vpop.permute.xlu0 %1489
        %1491 = vrot.lane.b32.xlu0 %v1404, 18
        %v1492 = vpop.permute.xlu0 %1491
        %1493 = vrot.lane.b32.xlu0 %v1406, 18
        %v1494 = vpop.permute.xlu0 %1493
        %1495 = vrot.lane.b32.xlu0 %v1408, 18
        %v1496 = vpop.permute.xlu0 %1495
        %1497 = vrot.lane.b32.xlu0 %v1410, 18
        %v1498 = vpop.permute.xlu0 %1497
        %1499 = vrot.lane.b32.xlu0 %v1412, 18
        %v1500 = vpop.permute.xlu0 %1499
        %1501 = vrot.lane.b32.xlu0 %v1414, 18
        %v1502 = vpop.permute.xlu0 %1501
        %1503 = vrot.lane.b32.xlu0 %v1416, 18
        %v1504 = vpop.permute.xlu0 %1503
        %1505 = vrot.lane.b32.xlu0 %v1418, 18
        %v1506 = vpop.permute.xlu0 %1505
        %1507 = vrot.lane.b32.xlu0 %v1420, 18
        %v1508 = vpop.permute.xlu0 %1507
        %1509 = vrot.lane.b32.xlu0 %v1422, 18
        %v1510 = vpop.permute.xlu0 %1509
        %1511 = vrot.lane.b32.xlu0 %v1424, 18
        %v1512 = vpop.permute.xlu0 %1511
        %1513 = vrot.lane.b32.xlu0 %v1426, 18
        %v1514 = vpop.permute.xlu0 %1513
        %1515 = vrot.lane.b32.xlu0 %v1428, 18
        %v1516 = vpop.permute.xlu0 %1515
        %1517 = vrot.lane.b32.xlu0 %v1430, 18
        %v1518 = vpop.permute.xlu0 %1517
        %1519 = vrot.lane.b32.xlu0 %v1432, 18
        %v1520 = vpop.permute.xlu0 %1519
        %1521 = vrot.lane.b32.xlu0 %v1434, 18
        %v1522 = vpop.permute.xlu0 %1521
        %1523 = vrot.lane.b32.xlu0 %v1436, 18
        %v1524 = vpop.permute.xlu0 %1523
        %1525 = vrot.lane.b32.xlu0 %v1438, 18
        %v1526 = vpop.permute.xlu0 %1525
        %1527 = vrot.lane.b32.xlu0 %v1440, 18
        %v1528 = vpop.permute.xlu0 %1527
        %1529 = vrot.lane.b32.xlu0 %v1442, 18
        %v1530 = vpop.permute.xlu0 %1529
        %1531 = vrot.lane.b32.xlu0 %v1444, 18
        %v1532 = vpop.permute.xlu0 %1531
        %1533 = vrot.lane.b32.xlu0 %v1446, 18
        %v1534 = vpop.permute.xlu0 %1533
        %1535 = vrot.lane.b32.xlu0 %v1448, 18
        %v1536 = vpop.permute.xlu0 %1535
        %1581 = vrot.lane.b32.xlu0 %v826, 24
        %v1582 = vpop.permute.xlu0 %1581
        %1583 = vrot.lane.b32.xlu0 %v827, 24
        %v1584 = vpop.permute.xlu0 %1583
        %1585 = vrot.lane.b32.xlu0 %v828, 24
        %v1586 = vpop.permute.xlu0 %1585
        %1587 = vrot.lane.b32.xlu0 %v829, 24
        %v1588 = vpop.permute.xlu0 %1587
        %1589 = vrot.lane.b32.xlu0 %v830, 24
        %v1590 = vpop.permute.xlu0 %1589
        %1591 = vrot.lane.b32.xlu0 %v831, 24
        %v1592 = vpop.permute.xlu0 %1591
        %1593 = vrot.lane.b32.xlu0 %v832, 24
        %v1594 = vpop.permute.xlu0 %1593
        %1595 = vrot.lane.b32.xlu0 %v833, 24
        %v1596 = vpop.permute.xlu0 %1595
        %1597 = vrot.lane.b32.xlu0 %v834, 24
        %v1598 = vpop.permute.xlu0 %1597
        %1599 = vrot.lane.b32.xlu0 %v835, 24
        %v1600 = vpop.permute.xlu0 %1599
        %1601 = vrot.lane.b32.xlu0 %v836, 24
        %v1602 = vpop.permute.xlu0 %1601
        %1603 = vrot.lane.b32.xlu0 %v837, 24
        %v1604 = vpop.permute.xlu0 %1603
        %1605 = vrot.lane.b32.xlu0 %v838, 24
        %v1606 = vpop.permute.xlu0 %1605
        %1607 = vrot.lane.b32.xlu0 %v839, 24
        %v1608 = vpop.permute.xlu0 %1607
        %1609 = vrot.lane.b32.xlu0 %v840, 24
        %v1610 = vpop.permute.xlu0 %1609
        %1611 = vrot.lane.b32.xlu0 %v841, 24
        %v1612 = vpop.permute.xlu0 %1611
        %1613 = vrot.lane.b32.xlu0 %v842, 24
        %v1614 = vpop.permute.xlu0 %1613
        %1615 = vrot.lane.b32.xlu0 %v843, 24
        %v1616 = vpop.permute.xlu0 %1615
        %1617 = vrot.lane.b32.xlu0 %v844, 24
        %v1618 = vpop.permute.xlu0 %1617
        %1619 = vrot.lane.b32.xlu0 %v845, 24
        %v1620 = vpop.permute.xlu0 %1619
        %1621 = vrot.lane.b32.xlu0 %v846, 24
        %v1622 = vpop.permute.xlu0 %1621
        %1623 = vrot.lane.b32.xlu0 %v847, 24
        %v1624 = vpop.permute.xlu0 %1623
        %1625 = vrot.lane.b32.xlu0 %v848, 24
        %v1626 = vpop.permute.xlu0 %1625
        %1627 = vrot.lane.b32.xlu0 %v849, 24
        %v1628 = vpop.permute.xlu0 %1627
        %1629 = vrot.lane.b32.xlu0 %v850, 24
        %v1630 = vpop.permute.xlu0 %1629
        %1631 = vrot.lane.b32.xlu0 %v851, 24
        %v1632 = vpop.permute.xlu0 %1631
        %1633 = vrot.lane.b32.xlu0 %v852, 24
        %v1634 = vpop.permute.xlu0 %1633
        %1635 = vrot.lane.b32.xlu0 %v853, 24
        %v1636 = vpop.permute.xlu0 %1635
        %1637 = vrot.lane.b32.xlu0 %v854, 24
        %v1638 = vpop.permute.xlu0 %1637
        %1639 = vrot.lane.b32.xlu0 %v855, 24
        %v1640 = vpop.permute.xlu0 %1639
        %1641 = vrot.lane.b32.xlu0 %v856, 24
        %v1642 = vpop.permute.xlu0 %1641
        %1643 = vrot.lane.b32.xlu0 %v857, 24
        %v1644 = vpop.permute.xlu0 %1643
        %1645 = vrot.lane.b32.xlu0 %v858, 24
        %v1646 = vpop.permute.xlu0 %1645
        %1647 = vrot.lane.b32.xlu0 %v859, 24
        %v1648 = vpop.permute.xlu0 %1647
        %1649 = vrot.lane.b32.xlu0 %v860, 24
        %v1650 = vpop.permute.xlu0 %1649
        %1651 = vrot.lane.b32.xlu0 %v861, 24
        %v1652 = vpop.permute.xlu0 %1651
        %1653 = vrot.lane.b32.xlu0 %v862, 24
        %v1654 = vpop.permute.xlu0 %1653
        %1655 = vrot.lane.b32.xlu0 %v863, 24
        %v1656 = vpop.permute.xlu0 %1655
        %1657 = vrot.lane.b32.xlu0 %v864, 24
        %v1658 = vpop.permute.xlu0 %1657
        %1659 = vrot.lane.b32.xlu0 %v865, 24
        %v1660 = vpop.permute.xlu0 %1659
        %1661 = vrot.lane.b32.xlu0 %v866, 24
        %v1662 = vpop.permute.xlu0 %1661
        %1663 = vrot.lane.b32.xlu0 %v867, 24
        %v1664 = vpop.permute.xlu0 %1663
        %1665 = vrot.lane.b32.xlu0 %v868, 24
        %v1666 = vpop.permute.xlu0 %1665
        %1667 = vrot.lane.b32.xlu0 %v869, 24
        %v1668 = vpop.permute.xlu0 %1667
        %vm1713 = vcmask 48128
        %v1714 = vsel %vm1713, %v825, %v1006
        %v1715 = vsel %vm1713, %v826, %v1008
        %v1716 = vsel %vm1713, %v827, %v1010
        %v1717 = vsel %vm1713, %v828, %v1012
        %v1718 = vsel %vm1713, %v829, %v1014
        %v1719 = vsel %vm1713, %v830, %v1016
        %v1720 = vsel %vm1713, %v831, %v1018
        %v1721 = vsel %vm1713, %v832, %v1020
        %v1722 = vsel %vm1713, %v833, %v1022
        %v1723 = vsel %vm1713, %v834, %v1024
        %v1724 = vsel %vm1713, %v835, %v1026
        %v1725 = vsel %vm1713, %v836, %v1028
        %v1726 = vsel %vm1713, %v837, %v1030
        %v1727 = vsel %vm1713, %v838, %v1032
        %v1728 = vsel %vm1713, %v839, %v1034
        %v1729 = vsel %vm1713, %v840, %v1036
        %v1730 = vsel %vm1713, %v841, %v1038
        %v1731 = vsel %vm1713, %v842, %v1040
        %v1732 = vsel %vm1713, %v843, %v1042
        %v1733 = vsel %vm1713, %v844, %v1044
        %v1734 = vsel %vm1713, %v845, %v1046
        %v1735 = vsel %vm1713, %v846, %v1048
        %v1736 = vsel %vm1713, %v847, %v1050
        %v1737 = vsel %vm1713, %v848, %v1052
        %v1738 = vsel %vm1713, %v849, %v1054
        %v1739 = vsel %vm1713, %v850, %v1056
        %v1740 = vsel %vm1713, %v851, %v1058
        %v1741 = vsel %vm1713, %v852, %v1060
        %v1742 = vsel %vm1713, %v853, %v1062
        %v1743 = vsel %vm1713, %v854, %v1064
        %v1744 = vsel %vm1713, %v855, %v1066
        %v1745 = vsel %vm1713, %v856, %v1068
        %v1746 = vsel %vm1713, %v857, %v1070
        %v1747 = vsel %vm1713, %v858, %v1072
        %v1748 = vsel %vm1713, %v859, %v1074
        %v1749 = vsel %vm1713, %v860, %v1076
        %v1750 = vsel %vm1713, %v861, %v1078
        %v1751 = vsel %vm1713, %v862, %v1080
        %v1752 = vsel %vm1713, %v863, %v1082
        %v1753 = vsel %vm1713, %v864, %v1084
        %v1754 = vsel %vm1713, %v865, %v1086
        %v1755 = vsel %vm1713, %v866, %v1088
        %v1756 = vsel %vm1713, %v867, %v1090
        %v1757 = vsel %vm1713, %v868, %v1092
        %vm1758 = vcmask 97280
        %v1759 = vsel %vm1758, %v1714, %v1228
        %v1760 = vsel %vm1758, %v1715, %v1230
        %v1761 = vsel %vm1758, %v1716, %v1232
        %v1762 = vsel %vm1758, %v1717, %v1234
        %v1763 = vsel %vm1758, %v1718, %v1236
        %v1764 = vsel %vm1758, %v1719, %v1238
        %v1765 = vsel %vm1758, %v1720, %v1240
        %v1766 = vsel %vm1758, %v1721, %v1242
        %v1767 = vsel %vm1758, %v1722, %v1244
        %v1768 = vsel %vm1758, %v1723, %v1246
        %v1769 = vsel %vm1758, %v1724, %v1248
        %v1770 = vsel %vm1758, %v1725, %v1250
        %v1771 = vsel %vm1758, %v1726, %v1252
        %v1772 = vsel %vm1758, %v1727, %v1254
        %v1773 = vsel %vm1758, %v1728, %v1256
        %v1774 = vsel %vm1758, %v1729, %v1258
        %v1775 = vsel %vm1758, %v1730, %v1260
        %v1776 = vsel %vm1758, %v1731, %v1262
        %v1777 = vsel %vm1758, %v1732, %v1264
        %v1778 = vsel %vm1758, %v1733, %v1266
        %v1779 = vsel %vm1758, %v1734, %v1268
        %v1780 = vsel %vm1758, %v1735, %v1270
        %v1781 = vsel %vm1758, %v1736, %v1272
        %v1782 = vsel %vm1758, %v1737, %v1274
        %v1783 = vsel %vm1758, %v1738, %v1276
        %v1784 = vsel %vm1758, %v1739, %v1278
        %v1785 = vsel %vm1758, %v1740, %v1280
        %v1786 = vsel %vm1758, %v1741, %v1282
        %v1787 = vsel %vm1758, %v1742, %v1284
        %v1788 = vsel %vm1758, %v1743, %v1286
        %v1789 = vsel %vm1758, %v1744, %v1288
        %v1790 = vsel %vm1758, %v1745, %v1290
        %v1791 = vsel %vm1758, %v1746, %v1292
        %v1792 = vsel %vm1758, %v1747, %v1294
        %v1793 = vsel %vm1758, %v1748, %v1296
        %v1794 = vsel %vm1758, %v1749, %v1298
        %v1795 = vsel %vm1758, %v1750, %v1300
        %v1796 = vsel %vm1758, %v1751, %v1302
        %v1797 = vsel %vm1758, %v1752, %v1304
        %v1798 = vsel %vm1758, %v1753, %v1306
        %v1799 = vsel %vm1758, %v1754, %v1308
        %v1800 = vsel %vm1758, %v1755, %v1310
        %v1801 = vsel %vm1758, %v1756, %v1312
        %v1802 = vsel %vm1758, %v1757, %v1314
        %vm1803 = vcmask 146432
        %v1804 = vsel %vm1803, %v1759, %v1450
        %v1805 = vsel %vm1803, %v1760, %v1452
        %v1806 = vsel %vm1803, %v1761, %v1454
        %v1807 = vsel %vm1803, %v1762, %v1456
        %v1808 = vsel %vm1803, %v1763, %v1458
        %v1809 = vsel %vm1803, %v1764, %v1460
        %v1810 = vsel %vm1803, %v1765, %v1462
        %v1811 = vsel %vm1803, %v1766, %v1464
        %v1812 = vsel %vm1803, %v1767, %v1466
        %v1813 = vsel %vm1803, %v1768, %v1468
        %v1814 = vsel %vm1803, %v1769, %v1470
        %v1815 = vsel %vm1803, %v1770, %v1472
        %v1816 = vsel %vm1803, %v1771, %v1474
        %v1817 = vsel %vm1803, %v1772, %v1476
        %v1818 = vsel %vm1803, %v1773, %v1478
        %v1819 = vsel %vm1803, %v1774, %v1480
        %v1820 = vsel %vm1803, %v1775, %v1482
        %v1821 = vsel %vm1803, %v1776, %v1484
        %v1822 = vsel %vm1803, %v1777, %v1486
        %v1823 = vsel %vm1803, %v1778, %v1488
        %v1824 = vsel %vm1803, %v1779, %v1490
        %v1825 = vsel %vm1803, %v1780, %v1492
        %v1826 = vsel %vm1803, %v1781, %v1494
        %v1827 = vsel %vm1803, %v1782, %v1496
        %v1828 = vsel %vm1803, %v1783, %v1498
        %v1829 = vsel %vm1803, %v1784, %v1500
        %v1830 = vsel %vm1803, %v1785, %v1502
        %v1831 = vsel %vm1803, %v1786, %v1504
        %v1832 = vsel %vm1803, %v1787, %v1506
        %v1833 = vsel %vm1803, %v1788, %v1508
        %v1834 = vsel %vm1803, %v1789, %v1510
        %v1835 = vsel %vm1803, %v1790, %v1512
        %v1836 = vsel %vm1803, %v1791, %v1514
        %v1837 = vsel %vm1803, %v1792, %v1516
        %v1838 = vsel %vm1803, %v1793, %v1518
        %v1839 = vsel %vm1803, %v1794, %v1520
        %v1840 = vsel %vm1803, %v1795, %v1522
        %v1841 = vsel %vm1803, %v1796, %v1524
        %v1842 = vsel %vm1803, %v1797, %v1526
        %v1843 = vsel %vm1803, %v1798, %v1528
        %v1844 = vsel %vm1803, %v1799, %v1530
        %v1845 = vsel %vm1803, %v1800, %v1532
        %v1846 = vsel %vm1803, %v1801, %v1534
        %v1847 = vsel %vm1803, %v1802, %v1536
        %vm1848 = vcmask 195584
        %v1849 = vsel %vm1848, %v1804, %v1582
        %v1850 = vsel %vm1848, %v1805, %v1584
        %v1851 = vsel %vm1848, %v1806, %v1586
        %v1852 = vsel %vm1848, %v1807, %v1588
        %v1853 = vsel %vm1848, %v1808, %v1590
        %v1854 = vsel %vm1848, %v1809, %v1592
        %v1855 = vsel %vm1848, %v1810, %v1594
        %v1856 = vsel %vm1848, %v1811, %v1596
        %v1857 = vsel %vm1848, %v1812, %v1598
        %v1858 = vsel %vm1848, %v1813, %v1600
        %v1859 = vsel %vm1848, %v1814, %v1602
        %v1860 = vsel %vm1848, %v1815, %v1604
        %v1861 = vsel %vm1848, %v1816, %v1606
        %v1862 = vsel %vm1848, %v1817, %v1608
        %v1863 = vsel %vm1848, %v1818, %v1610
        %v1864 = vsel %vm1848, %v1819, %v1612
        %v1865 = vsel %vm1848, %v1820, %v1614
        %v1866 = vsel %vm1848, %v1821, %v1616
        %v1867 = vsel %vm1848, %v1822, %v1618
        %v1868 = vsel %vm1848, %v1823, %v1620
        %v1869 = vsel %vm1848, %v1824, %v1622
        %v1870 = vsel %vm1848, %v1825, %v1624
        %v1871 = vsel %vm1848, %v1826, %v1626
        %v1872 = vsel %vm1848, %v1827, %v1628
        %v1873 = vsel %vm1848, %v1828, %v1630
        %v1874 = vsel %vm1848, %v1829, %v1632
        %v1875 = vsel %vm1848, %v1830, %v1634
        %v1876 = vsel %vm1848, %v1831, %v1636
        %v1877 = vsel %vm1848, %v1832, %v1638
        %v1878 = vsel %vm1848, %v1833, %v1640
        %v1879 = vsel %vm1848, %v1834, %v1642
        %v1880 = vsel %vm1848, %v1835, %v1644
        %v1881 = vsel %vm1848, %v1836, %v1646
        %v1882 = vsel %vm1848, %v1837, %v1648
        %v1883 = vsel %vm1848, %v1838, %v1650
        %v1884 = vsel %vm1848, %v1839, %v1652
        %v1885 = vsel %vm1848, %v1840, %v1654
        %v1886 = vsel %vm1848, %v1841, %v1656
        %v1887 = vsel %vm1848, %v1842, %v1658
        %v1888 = vsel %vm1848, %v1843, %v1660
        %v1889 = vsel %vm1848, %v1844, %v1662
        %v1890 = vsel %vm1848, %v1845, %v1664
        %v1891 = vsel %vm1848, %v1846, %v1666
        %v1892 = vsel %vm1848, %v1847, %v1668
        %1905 = vrot.lane.b32.xlu0 %v1857, 30
        %v1906 = vpop.permute.xlu0 %1905
        %1907 = vrot.lane.b32.xlu0 %v1858, 30
        %v1908 = vpop.permute.xlu0 %1907
        %1909 = vrot.lane.b32.xlu0 %v1859, 30
        %v1910 = vpop.permute.xlu0 %1909
        %1911 = vrot.lane.b32.xlu0 %v1860, 30
        %v1912 = vpop.permute.xlu0 %1911
        %1913 = vrot.lane.b32.xlu0 %v1861, 30
        %v1914 = vpop.permute.xlu0 %1913
        %1915 = vrot.lane.b32.xlu0 %v1862, 30
        %v1916 = vpop.permute.xlu0 %1915
        %1917 = vrot.lane.b32.xlu0 %v1863, 30
        %v1918 = vpop.permute.xlu0 %1917
        %1919 = vrot.lane.b32.xlu0 %v1864, 30
        %v1920 = vpop.permute.xlu0 %1919
        %1921 = vrot.lane.b32.xlu0 %v1865, 30
        %v1922 = vpop.permute.xlu0 %1921
        %1923 = vrot.lane.b32.xlu0 %v1866, 30
        %v1924 = vpop.permute.xlu0 %1923
        %1925 = vrot.lane.b32.xlu0 %v1867, 30
        %v1926 = vpop.permute.xlu0 %1925
        %1927 = vrot.lane.b32.xlu0 %v1868, 30
        %v1928 = vpop.permute.xlu0 %1927
        %1949 = vrot.lane.b32.xlu0 %v1865, 60
        %v1950 = vpop.permute.xlu0 %1949
        %1951 = vrot.lane.b32.xlu0 %v1866, 60
        %v1952 = vpop.permute.xlu0 %1951
        %1953 = vrot.lane.b32.xlu0 %v1867, 60
        %v1954 = vpop.permute.xlu0 %1953
        %1955 = vrot.lane.b32.xlu0 %v1868, 60
        %v1956 = vpop.permute.xlu0 %1955
        %1957 = vrot.lane.b32.xlu0 %v1869, 60
        %v1958 = vpop.permute.xlu0 %1957
        %1959 = vrot.lane.b32.xlu0 %v1870, 60
        %v1960 = vpop.permute.xlu0 %1959
        %1961 = vrot.lane.b32.xlu0 %v1871, 60
        %v1962 = vpop.permute.xlu0 %1961
        %1963 = vrot.lane.b32.xlu0 %v1872, 60
        %v1964 = vpop.permute.xlu0 %1963
        %1965 = vrot.lane.b32.xlu0 %v1873, 60
        %v1966 = vpop.permute.xlu0 %1965
        %1967 = vrot.lane.b32.xlu0 %v1874, 60
        %v1968 = vpop.permute.xlu0 %1967
        %1969 = vrot.lane.b32.xlu0 %v1875, 60
        %v1970 = vpop.permute.xlu0 %1969
        %1971 = vrot.lane.b32.xlu0 %v1876, 60
        %v1972 = vpop.permute.xlu0 %1971
        %1993 = vrot.lane.b32.xlu0 %v1873, 90
        %v1994 = vpop.permute.xlu0 %1993
        %1995 = vrot.lane.b32.xlu0 %v1874, 90
        %v1996 = vpop.permute.xlu0 %1995
        %1997 = vrot.lane.b32.xlu0 %v1875, 90
        %v1998 = vpop.permute.xlu0 %1997
        %1999 = vrot.lane.b32.xlu0 %v1876, 90
        %v2000 = vpop.permute.xlu0 %1999
        %2001 = vrot.lane.b32.xlu0 %v1877, 90
        %v2002 = vpop.permute.xlu0 %2001
        %2003 = vrot.lane.b32.xlu0 %v1878, 90
        %v2004 = vpop.permute.xlu0 %2003
        %2005 = vrot.lane.b32.xlu0 %v1879, 90
        %v2006 = vpop.permute.xlu0 %2005
        %2007 = vrot.lane.b32.xlu0 %v1880, 90
        %v2008 = vpop.permute.xlu0 %2007
        %2009 = vrot.lane.b32.xlu0 %v1881, 90
        %v2010 = vpop.permute.xlu0 %2009
        %2011 = vrot.lane.b32.xlu0 %v1882, 90
        %v2012 = vpop.permute.xlu0 %2011
        %2013 = vrot.lane.b32.xlu0 %v1883, 90
        %v2014 = vpop.permute.xlu0 %2013
        %2015 = vrot.lane.b32.xlu0 %v1884, 90
        %v2016 = vpop.permute.xlu0 %2015
        %2037 = vrot.lane.b32.xlu0 %v1881, 120
        %v2038 = vpop.permute.xlu0 %2037
        %2039 = vrot.lane.b32.xlu0 %v1882, 120
        %v2040 = vpop.permute.xlu0 %2039
        %2041 = vrot.lane.b32.xlu0 %v1883, 120
        %v2042 = vpop.permute.xlu0 %2041
        %2043 = vrot.lane.b32.xlu0 %v1884, 120
        %v2044 = vpop.permute.xlu0 %2043
        %2045 = vrot.lane.b32.xlu0 %v1885, 120
        %v2046 = vpop.permute.xlu0 %2045
        %2047 = vrot.lane.b32.xlu0 %v1886, 120
        %v2048 = vpop.permute.xlu0 %2047
        %2049 = vrot.lane.b32.xlu0 %v1887, 120
        %v2050 = vpop.permute.xlu0 %2049
        %2051 = vrot.lane.b32.xlu0 %v1888, 120
        %v2052 = vpop.permute.xlu0 %2051
        %2053 = vrot.lane.b32.xlu0 %v1889, 120
        %v2054 = vpop.permute.xlu0 %2053
        %2055 = vrot.lane.b32.xlu0 %v1890, 120
        %v2056 = vpop.permute.xlu0 %2055
        %2057 = vrot.lane.b32.xlu0 %v1891, 120
        %v2058 = vpop.permute.xlu0 %2057
        %2059 = vrot.lane.b32.xlu0 %v1892, 120
        %v2060 = vpop.permute.xlu0 %2059
        %vm2073 = vcmask 244736
        %v2074 = vsel %vm2073, %v1849, %v1906
        %v2075 = vsel %vm2073, %v1850, %v1908
        %v2076 = vsel %vm2073, %v1851, %v1910
        %v2077 = vsel %vm2073, %v1852, %v1912
        %v2078 = vsel %vm2073, %v1853, %v1914
        %v2079 = vsel %vm2073, %v1854, %v1916
        %v2080 = vsel %vm2073, %v1855, %v1918
        %v2081 = vsel %vm2073, %v1856, %v1920
        %v2082 = vsel %vm2073, %v1857, %v1922
        %v2083 = vsel %vm2073, %v1858, %v1924
        %v2084 = vsel %vm2073, %v1859, %v1926
        %v2085 = vsel %vm2073, %v1860, %v1928
        %vm2086 = vcmask 490496
        %v2087 = vsel %vm2086, %v2074, %v1950
        %v2088 = vsel %vm2086, %v2075, %v1952
        %v2089 = vsel %vm2086, %v2076, %v1954
        %v2090 = vsel %vm2086, %v2077, %v1956
        %v2091 = vsel %vm2086, %v2078, %v1958
        %v2092 = vsel %vm2086, %v2079, %v1960
        %v2093 = vsel %vm2086, %v2080, %v1962
        %v2094 = vsel %vm2086, %v2081, %v1964
        %v2095 = vsel %vm2086, %v2082, %v1966
        %v2096 = vsel %vm2086, %v2083, %v1968
        %v2097 = vsel %vm2086, %v2084, %v1970
        %v2098 = vsel %vm2086, %v2085, %v1972
        %vm2099 = vcmask 736256
        %v2100 = vsel %vm2099, %v2087, %v1994
        %v2101 = vsel %vm2099, %v2088, %v1996
        %v2102 = vsel %vm2099, %v2089, %v1998
        %v2103 = vsel %vm2099, %v2090, %v2000
        %v2104 = vsel %vm2099, %v2091, %v2002
        %v2105 = vsel %vm2099, %v2092, %v2004
        %v2106 = vsel %vm2099, %v2093, %v2006
        %v2107 = vsel %vm2099, %v2094, %v2008
        %v2108 = vsel %vm2099, %v2095, %v2010
        %v2109 = vsel %vm2099, %v2096, %v2012
        %v2110 = vsel %vm2099, %v2097, %v2014
        %v2111 = vsel %vm2099, %v2098, %v2016
        %vm2112 = vcmask 982016
        %v2113 = vsel %vm2112, %v2100, %v2038
        %v2114 = vsel %vm2112, %v2101, %v2040
        %v2115 = vsel %vm2112, %v2102, %v2042
        %v2116 = vsel %vm2112, %v2103, %v2044
        %v2117 = vsel %vm2112, %v2104, %v2046
        %v2118 = vsel %vm2112, %v2105, %v2048
        %v2119 = vsel %vm2112, %v2106, %v2050
        %v2120 = vsel %vm2112, %v2107, %v2052
        %v2121 = vsel %vm2112, %v2108, %v2054
        %v2122 = vsel %vm2112, %v2109, %v2056
        %v2123 = vsel %vm2112, %v2110, %v2058
        %v2124 = vsel %vm2112, %v2111, %v2060
        %v2125 = vld [vmem:[%s1 + $0x80] sm:$0xff]
        %v2126 = vld [vmem:[%s1 + $0x88] sm:$0xff]
        %v2127 = vld [vmem:[%s1 + $0x90] sm:$0xff]
        %v2128 = vld [vmem:[%s1 + $0x98] sm:$0xff]
        %v2129 = vld [vmem:[%s1 + $0xa0] sm:$0xff]
        %v2130 = vld [vmem:[%s1 + $0xa8] sm:$0xff]
        %v2131 = vld [vmem:[%s1 + $0xb0] sm:$0xff]
        %v2132 = vld [vmem:[%s1 + $0xb8] sm:$0xff]
        %v2133 = vld [vmem:[%s1 + $0xc0] sm:$0xff]
        %v2134 = vld [vmem:[%s1 + $0xc8] sm:$0xff]
        %v2135 = vld [vmem:[%s1 + $0xd0] sm:$0xff]
        %v2136 = vld [vmem:[%s1 + $0xd8] sm:$0xff]
        %v2137 = vld [vmem:[%s1 + $0xe0] sm:$0xff]
        %v2138 = vld [vmem:[%s1 + $0xe8] sm:$0xff]
        %v2139 = vld [vmem:[%s1 + $0xf0] sm:$0xff]
        %v2140 = vld [vmem:[%s1 + $0xf8] sm:$0xff]
        %v2141 = vld [vmem:[%s1 + $0x100] sm:$0xff]
        %v2142 = vld [vmem:[%s1 + $0x108] sm:$0xff]
        %v2143 = vld [vmem:[%s1 + $0x110] sm:$0x3f]
        %v2144 = vld [vmem:[%s1 + $0x188] sm:$0x1]
        %v2145 = vlaneseq
        %v2146 = vshrl.u32 %v2145, 7
        %v2147 = vsub.s32 0, %v2146
        %v2148 = vrot.slane %v2144, %v2147
        %vm2149 = vcmask 179200
        %v2150 = vsel %vm2149, %v2038, 0
        %v2152 = vsel %vm2149, %v2040, 0
        %v2154 = vsel %vm2149, %v2042, 0
        %v2156 = vsel %vm2149, %v2044, 0
        %v2158 = vsel %vm2149, %v2046, 0
        %v2160 = vsel %vm2149, %v2048, 0
        %v2162 = vsel %vm2149, %v2050, 0
        %v2164 = vsel %vm2149, %v2052, 0
        %v2166 = vsel %vm2149, %v2054, 0
        %v2168 = vsel %vm2149, %v2056, 0
        %v2170 = vsel %vm2149, %v2058, 0
        %v2172 = vsel %vm2149, %v2060, 0
        %v2175 = vsel %vm915, %v2143, 0
        %2177 = vmatprep.subr.mxu0 0.0
        %2178 = vmatpush1.msra.mxu0 %v2140
        %2179 = vmatprep.subr.mxu0 0.0
        %2180 = vmatpush1.msra.mxu0 %v2139
        %2181 = vmatprep.subr.mxu0 0.0
        %2182 = vmatpush1.msra.mxu0 %v2138
        %2183 = vmatprep.subr.mxu0 0.0
        %2184 = vmatpush1.msra.mxu0 %v2137
        %2185 = vmatprep.subr.mxu0 0.0
        %2186 = vmatpush1.msra.mxu0 %v2136
        %2187 = vmatprep.subr.mxu0 0.0
        %2188 = vmatpush1.msra.mxu0 %v2135
        %2189 = vmatprep.subr.mxu0 0.0
        %2190 = vmatpush1.msra.mxu0 %v2134
        %2191 = vmatprep.subr.mxu0 0.0
        %2192 = vmatpush1.msra.mxu0 %v2133
        %2193 = vmatprep.subr.mxu0 0.0
        %2194 = vmatpush1.msra.mxu0 %v2132
        %2195 = vmatprep.subr.mxu0 0.0
        %2196 = vmatpush1.msra.mxu0 %v2131
        %2197 = vmatprep.subr.mxu0 0.0
        %2198 = vmatpush1.msra.mxu0 %v2130
        %2199 = vmatprep.subr.mxu0 0.0
        %2200 = vmatpush1.msra.mxu0 %v2129
        %2201 = vmatprep.subr.mxu0 0.0
        %2202 = vmatpush1.msra.mxu0 %v2128
        %2203 = vmatprep.subr.mxu0 0.0
        %2204 = vmatpush1.msra.mxu0 %v2127
        %2205 = vmatprep.subr.mxu0 0.0
        %2206 = vmatpush1.msra.mxu0 %v2126
        %2207 = vmatprep.subr.mxu0 0.0
        %2208 = vmatpush1.msra.mxu0 %v2125
        %2209 = vmatprep.subr.mxu0 0.0
        %2210 = vmatpush2.msra.mxu0 0.0
        %2211 = vmatprep.subr.mxu0 0.0
        %2212 = vmatpush2.msra.mxu0 0.0
        %2213 = vmatprep.subr.mxu0 0.0
        %2214 = vmatpush2.msra.mxu0 0.0
        %2215 = vmatprep.subr.mxu0 0.0
        %2216 = vmatpush2.msra.mxu0 0.0
        %2217 = vmatprep.subr.mxu0 0.0
        %2218 = vmatpush2.msra.mxu0 0.0
        %2219 = vmatprep.subr.mxu0 0.0
        %2220 = vmatpush2.msra.mxu0 0.0
        %2221 = vmatprep.subr.mxu0 0.0
        %2222 = vmatpush2.msra.mxu0 0.0
        %2223 = vmatprep.subr.mxu0 0.0
        %2224 = vmatpush2.msra.mxu0 0.0
        %2225 = vmatprep.subr.mxu0 0.0
        %2226 = vmatpush2.msra.mxu0 0.0
        %2227 = vmatprep.subr.mxu0 0.0
        %2228 = vmatpush2.msra.mxu0 0.0
        %2229 = vmatprep.subr.mxu0 0.0
        %2230 = vmatpush2.msra.mxu0 0.0
        %2231 = vmatprep.subr.mxu0 0.0
        %2232 = vmatpush2.msra.mxu0 0.0
        %2233 = vmatprep.subr.mxu0 0.0
        %2234 = vmatpush2.msra.mxu0 0.0
        %2235 = vmatprep.subr.mxu0 0.0
        %2236 = vmatpush2.msra.mxu0 %v2175
        %2237 = vmatprep.subr.mxu0 0.0
        %2238 = vmatpush2.msra.mxu0 %v2142
        %2239 = vmatprep.subr.mxu0 0.0
        %2240 = vmatpush2.msra.mxu0 %v2141
        %2241 = vmatprep.mubr.f32.mxu0 %v2150
        %2242 = vmatmul.mubr.f32.gmra.mxu0 %v2113
        %v2243 = vpop.f32.mrf.mxu0
        %v2244 = vadd.f32 %v2148, %v2243
        %v2245 = vpop.f32.mrf.mxu0
        %2246 = vmatprep.mubr.f32.mxu0 %v2152
        %2247 = vmatmul.mubr.f32.gmra.mxu0 %v2114
        %v2248 = vpop.f32.mrf.mxu0
        %v2249 = vadd.f32 %v2148, %v2248
        %v2250 = vpop.f32.mrf.mxu0
        %2251 = vmatprep.mubr.f32.mxu0 %v2154
        %2252 = vmatmul.mubr.f32.gmra.mxu0 %v2115
        %v2253 = vpop.f32.mrf.mxu0
        %v2254 = vadd.f32 %v2148, %v2253
        %v2255 = vpop.f32.mrf.mxu0
        %2256 = vmatprep.mubr.f32.mxu0 %v2156
        %2257 = vmatmul.mubr.f32.gmra.mxu0 %v2116
        %v2258 = vpop.f32.mrf.mxu0
        %v2259 = vadd.f32 %v2148, %v2258
        %v2260 = vpop.f32.mrf.mxu0
        %2261 = vmatprep.mubr.f32.mxu0 %v2158
        %2262 = vmatmul.mubr.f32.gmra.mxu0 %v2117
        %v2263 = vpop.f32.mrf.mxu0
        %v2264 = vpop.f32.mrf.mxu0
        %2265 = vmatprep.mubr.f32.mxu0 %v2160
        %2266 = vmatmul.mubr.f32.gmra.mxu0 %v2118
        %v2267 = vpop.f32.mrf.mxu0
        %v2268 = vpop.f32.mrf.mxu0
        %2269 = vmatprep.mubr.f32.mxu0 %v2162
        %2270 = vmatmul.mubr.f32.gmra.mxu0 %v2119
        %v2271 = vpop.f32.mrf.mxu0
        %v2272 = vpop.f32.mrf.mxu0
        %2273 = vmatprep.mubr.f32.mxu0 %v2164
        %2274 = vmatmul.mubr.f32.gmra.mxu0 %v2120
        %v2275 = vpop.f32.mrf.mxu0
        %v2276 = vpop.f32.mrf.mxu0
        %2277 = vmatprep.mubr.f32.mxu0 %v2166
        %2278 = vmatmul.mubr.f32.gmra.mxu0 %v2121
        %v2279 = vpop.f32.mrf.mxu0
        %v2280 = vadd.f32 %v2148, %v2279
        %v2281 = vpop.f32.mrf.mxu0
        %2282 = vmatprep.mubr.f32.mxu0 %v2168
        %2283 = vmatmul.mubr.f32.gmra.mxu0 %v2122
        %v2284 = vpop.f32.mrf.mxu0
        %v2285 = vadd.f32 %v2148, %v2284
        %v2286 = vpop.f32.mrf.mxu0
        %2287 = vmatprep.mubr.f32.mxu0 %v2170
        %2288 = vmatmul.mubr.f32.gmra.mxu0 %v2123
        %v2289 = vpop.f32.mrf.mxu0
        %v2290 = vadd.f32 %v2148, %v2289
        %v2291 = vpop.f32.mrf.mxu0
        %2292 = vmatprep.mubr.f32.mxu0 %v2172
        %2293 = vmatmul.mubr.f32.gmra.mxu0 %v2124
        %v2294 = vpop.f32.mrf.mxu0
        %v2295 = vadd.f32 %v2148, %v2294
        %v2296 = vpop.f32.mrf.mxu0
        %2297 = vdwg.mxu0
        %v2298 = vmax.f32 %v2244, 0.0
        %v2299 = vmax.f32 %v2249, 0.0
        %v2300 = vmax.f32 %v2254, 0.0
        %v2301 = vmax.f32 %v2259, 0.0
        %v2302 = vmax.f32 %v2280, 0.0
        %v2303 = vmax.f32 %v2285, 0.0
        %v2304 = vmax.f32 %v2290, 0.0
        %v2305 = vmax.f32 %v2295, 0.0
        %v2314 = vrot.slane %v2298, 2
        %v2315 = vrot.slane %v2299, 2
        %v2316 = vsel %vm915, %v2314, %v2315
        %v2317 = vrot.slane %v2300, 2
        %v2318 = vsel %vm915, %v2315, %v2317
        %v2319 = vrot.slane %v2301, 2
        %v2320 = vsel %vm915, %v2317, %v2319
        %v2321 = vrot.slane %v2302, 2
        %v2322 = vrot.slane %v2303, 2
        %v2323 = vsel %vm915, %v2321, %v2322
        %v2324 = vrot.slane %v2304, 2
        %v2325 = vsel %vm915, %v2322, %v2324
        %v2326 = vrot.slane %v2305, 2
        %v2327 = vsel %vm915, %v2324, %v2326
        %v2334 = vmax.f32 %v2298, %v2316
        %v2335 = vmax.f32 %v2299, %v2318
        %v2336 = vmax.f32 %v2300, %v2320
        %v2337 = vmax.f32 %v2302, %v2323
        %v2338 = vmax.f32 %v2303, %v2325
        %v2339 = vmax.f32 %v2304, %v2327
        %v2340 = vmax.f32 %v2334, %v2337
        %v2341 = vmax.f32 %v2335, %v2338
        %v2342 = vmax.f32 %v2336, %v2339
        %v2344 = vrot.slane %v2340, 4
        %2345 = vrot.lane.b32.xlu0 %v2344, 20
        %v2346 = vpop.permute.xlu0 %2345
        %2349 = vrot.lane.b32.xlu0 %v2341, 40
        %v2350 = vpop.permute.xlu0 %2349
        %v2352 = vrot.slane %v2341, 4
        %2353 = vrot.lane.b32.xlu0 %v2352, 60
        %v2354 = vpop.permute.xlu0 %2353
        %2357 = vrot.lane.b32.xlu0 %v2342, 80
        %v2358 = vpop.permute.xlu0 %2357
        %vm2360 = vcmask 162816
        %v2361 = vsel %vm2360, %v2340, %v2346
        %vm2362 = vcmask 326656
        %v2363 = vsel %vm2362, %v2361, %v2350
        %v2364 = vsel %vm2086, %v2363, %v2354
        %vm2365 = vcmask 654336
        %v2366 = vsel %vm2365, %v2364, %v2358
        %v2367 = vld [vmem:[%s1 + $0x118] sm:$0xff]
        %v2368 = vld [vmem:[%s1 + $0x120] sm:$0xff]
        %v2369 = vld [vmem:[%s1 + $0x128] sm:$0xff]
        %v2370 = vld [vmem:[%s1 + $0x130] sm:$0xff]
        %v2371 = vld [vmem:[%s1 + $0x138] sm:$0xff]
        %v2372 = vld [vmem:[%s1 + $0x140] sm:$0xff]
        %v2373 = vld [vmem:[%s1 + $0x148] sm:$0xff]
        %v2374 = vld [vmem:[%s1 + $0x150] sm:$0xff]
        %v2375 = vld [vmem:[%s1 + $0x158] sm:$0xff]
        %v2376 = vld [vmem:[%s1 + $0x160] sm:$0xff]
        %v2377 = vld [vmem:[%s1 + $0x168] sm:$0xff]
        %v2378 = vld [vmem:[%s1 + $0x170] sm:$0xff]
        %v2379 = vld [vmem:[%s1 + $0x178] sm:$0xf]
        %v2380 = vld [vmem:[%s1 + $0x190] sm:$0x1]
        %vm2381 = vcmask 818176
        %v2383 = vsel %vm2381, %v2366, 0
        %v2386 = vsel %vm1137, %v2379, 0
        %2388 = vmatprep.subr.mxu0 0.0
        %2389 = vmatpush1.msra.mxu0 0.0
        %2390 = vmatprep.subr.mxu0 0.0
        %2391 = vmatpush1.msra.mxu0 0.0
        %2392 = vmatprep.subr.mxu0 0.0
        %2393 = vmatpush1.msra.mxu0 0.0
        %2394 = vmatprep.subr.mxu0 0.0
        %2395 = vmatpush1.msra.mxu0 %v2386
        %2396 = vmatprep.subr.mxu0 0.0
        %2397 = vmatpush1.msra.mxu0 %v2378
        %2398 = vmatprep.subr.mxu0 0.0
        %2399 = vmatpush1.msra.mxu0 %v2377
        %2400 = vmatprep.subr.mxu0 0.0
        %2401 = vmatpush1.msra.mxu0 %v2376
        %2402 = vmatprep.subr.mxu0 0.0
        %2403 = vmatpush1.msra.mxu0 %v2375
        %2404 = vmatprep.subr.mxu0 0.0
        %2405 = vmatpush1.msra.mxu0 %v2374
        %2406 = vmatprep.subr.mxu0 0.0
        %2407 = vmatpush1.msra.mxu0 %v2373
        %2408 = vmatprep.subr.mxu0 0.0
        %2409 = vmatpush1.msra.mxu0 %v2372
        %2410 = vmatprep.subr.mxu0 0.0
        %2411 = vmatpush1.msra.mxu0 %v2371
        %2412 = vmatprep.subr.mxu0 0.0
        %2413 = vmatpush1.msra.mxu0 %v2370
        %2414 = vmatprep.subr.mxu0 0.0
        %2415 = vmatpush1.msra.mxu0 %v2369
        %2416 = vmatprep.subr.mxu0 0.0
        %2417 = vmatpush1.msra.mxu0 %v2368
        %2418 = vmatprep.subr.mxu0 0.0
        %2419 = vmatpush1.msra.mxu0 %v2367
        %2420 = vmatprep.subr.mxu0 0.0
        %2421 = vmatpush2.msra.mxu0 0.0
        %2422 = vmatprep.subr.mxu0 0.0
        %2423 = vmatpush2.msra.mxu0 0.0
        %2424 = vmatprep.subr.mxu0 0.0
        %2425 = vmatpush2.msra.mxu0 0.0
        %2426 = vmatprep.subr.mxu0 0.0
        %2427 = vmatpush2.msra.mxu0 0.0
        %2428 = vmatprep.subr.mxu0 0.0
        %2429 = vmatpush2.msra.mxu0 0.0
        %2430 = vmatprep.subr.mxu0 0.0
        %2431 = vmatpush2.msra.mxu0 0.0
        %2432 = vmatprep.subr.mxu0 0.0
        %2433 = vmatpush2.msra.mxu0 0.0
        %2434 = vmatprep.subr.mxu0 0.0
        %2435 = vmatpush2.msra.mxu0 0.0
        %2436 = vmatprep.subr.mxu0 0.0
        %2437 = vmatpush2.msra.mxu0 0.0
        %2438 = vmatprep.subr.mxu0 0.0
        %2439 = vmatpush2.msra.mxu0 0.0
        %2440 = vmatprep.subr.mxu0 0.0
        %2441 = vmatpush2.msra.mxu0 0.0
        %2442 = vmatprep.subr.mxu0 0.0
        %2443 = vmatpush2.msra.mxu0 0.0
        %2444 = vmatprep.subr.mxu0 0.0
        %2445 = vmatpush2.msra.mxu0 0.0
        %2446 = vmatprep.subr.mxu0 0.0
        %2447 = vmatpush2.msra.mxu0 0.0
        %2448 = vmatprep.subr.mxu0 0.0
        %2449 = vmatpush2.msra.mxu0 0.0
        %2450 = vmatprep.subr.mxu0 0.0
        %2451 = vmatpush2.msra.mxu0 0.0
        %2452 = vmatprep.mubr.f32.mxu0 0.0
        %2453 = vmatmul.mubr.f32.gmra.mxu0 %v2383
        %v2454 = vpop.f32.mrf.mxu0
        %v2455 = vadd.f32 %v2380, %v2454
        %v2456 = vpop.f32.mrf.mxu0
        %2457 = vdwg.mxu0
        %v2458 = vmax.f32 %v2455, 0.0
        %2459 = vst [vmem:[%s135] sm:$0x1] %v2458
        %s2460 = sand.u32 %s71, 1
        %s2461 = scalar_lea.sflag [#allocation3], %s2460
        %s2462 = sand.u32 %s71, 1
        %s2463 = scalar_lea.vmem [#allocation2], %s2462
        // Predicated region
        $region29: #{simple_cnn_forward.1} parent=27 // pred_check
          %p2464 = pneg %p81
        $region30: #{simple_cnn_forward.1} parent=27 // pred_check_branch
          %2466 = sbr.rel (%p2464) target = $region32
        $region31: #{simple_cnn_forward.1} parent=27 // pred_region
          %s2468 = ssub.s32 16, 16
          %2469 = vsyncadd %s2461, %s2468
          %s2470 = smul.addr %s16, 16
          %s2471 = scalar_lea.hbm %s2, %s2470
          %s2473 = sshll.u32 %s2463, 4
          %s2474 = int_to_ptr.vmem [resolvable:$true] %s2473
          %2476 = dma.vmem_to_hbm [thread:$0]  %s2474, 16, %s2471, %s2461
        $region32: #{simple_cnn_forward.1} parent=27 // pred_fallthru
          _
      $region28: #{simple_cnn_forward.1} parent=5 // pred_fallthru
        _
      %p2477 = scmp.le.s32.totalorder 2, %s11
      // Predicated region
      $region33: #{simple_cnn_forward.1} parent=5 // pred_check
        %p2478 = pneg %p2477
      $region34: #{simple_cnn_forward.1} parent=5 // pred_check_branch
        %2480 = sbr.rel (%p2478) target = $region36
      $region35: #{simple_cnn_forward.1} parent=5 // pred_region
        %s2481 = ssub.s32 %s11, 2
        // Predicated region
        $region37: #{simple_cnn_forward.1} parent=35 // pred_check
          %p2482 = pneg %p87
        $region38: #{simple_cnn_forward.1} parent=35 // pred_check_branch
          %2484 = sbr.rel (%p2482) target = $region40
        $region39: #{simple_cnn_forward.1} parent=35 // pred_region
          %s2485 = sand.u32 %s72, 1
          %s2486 = scalar_lea.sflag [#allocation3], %s2485
          %s2487 = sand.u32 %s72, 1
          %s2488 = scalar_lea.vmem [#allocation2], %s2487
          %2489 = dma.done %s2486, 16
        $region40: #{simple_cnn_forward.1} parent=35 // pred_fallthru
          _
      $region36: #{simple_cnn_forward.1} parent=5 // pred_fallthru
        _
    $region6: #{simple_cnn_forward.1} parent=1 // loop_footer
      %s15 = sadd.s32 1, %s11
    $region7: #{simple_cnn_forward.1} parent=1 // loop_footer_branch
      %10 = sbr.rel target = $region3
    $region8: #{simple_cnn_forward.1} parent=1 // loop_exit
      _
    %2490 = vsyncpa [#allocation3], 1
    %s2491 = scalar_lea.sflag [#allocation3], 1
    %2492 = vsyncpa %s2491, 1

</llo_original>
